<compile_context>
chip_gen: v7x
topology: tpu7x:2x2x1
jax: 0.10.0
libtpu: 0.0.40
codegen_flags: <defaults>
</compile_context>

<pallas_src>
import functools

import jax
import jax.numpy as jnp
from jax import lax
from jax.experimental import pallas as pl
from jax.experimental.pallas import tpu as pltpu


def _conv_bn_relu_kernel(x_ref, w_ref, scale_ref, bias_ref, o_ref, *,
                         kernel_size):
    # x_ref:     (..., TR+K-1, W+K-1, Cin)  bf16  halo'd input window
    # w_ref:     (K, K*Cin, Cout)           bf16  unscaled conv weights
    # scale_ref: (1, Cout)                  f32   gamma / sqrt(var + eps)
    # bias_ref:  (1, Cout)                  f32   (conv_bias - mean)*scale + beta
    # o_ref:     (1, TR, W, Cout)           bf16
    K = kernel_size
    tr, w_out, cout = o_ref.shape[-3:]
    cin = x_ref.shape[-1]

    x = x_ref[...]
    x = x.reshape(x.shape[-3:])                       # (TR+K-1, W+K-1, Cin)

    # One dot per kernel row (contraction depth K*Cin), f32 accumulation.
    acc = None
    for kh in range(K):                               # unrolled, K == 3
        row = x[kh:kh + tr]                           # (TR, W+K-1, Cin)
        taps = [row[:, kw:kw + w_out, :] for kw in range(K)]
        lhs = jnp.concatenate(taps, axis=-1).reshape(tr * w_out, K * cin)
        d = jnp.dot(lhs, w_ref[kh], preferred_element_type=jnp.float32)
        acc = d if acc is None else acc + d

    # BN scale applied in f32 here (not folded into bf16 weights) to avoid
    # amplifying quantization error when running_var is tiny.
    y = jnp.maximum(acc * scale_ref[...] + bias_ref[...], 0.0)
    o_ref[0] = y.reshape(tr, w_out, cout).astype(o_ref.dtype)


def _round_up(x, m):
    return ((x + m - 1) // m) * m


def _vmem_capacity_bytes(default=64 * 1024 * 1024):
    """Per-TensorCore VMEM (64 MiB on v7x, 128 MiB on v5e/v6e); safe default."""
    try:
        info = pltpu.get_tpu_info()
        cap = getattr(info, "vmem_capacity_bytes", None)
        if cap:
            return int(cap)
    except Exception:
        pass
    return default


def _tile_footprint_bytes(row_tile, W, Cin, Cout, K):
    """(8,128)-padding-aware VMEM working set for one grid step (bf16 compute)."""
    trp = row_tile + K - 1
    lane_in = _round_up(Cin, 128)
    lane_out = _round_up(Cout, 128)
    in_tile = trp * _round_up(W + K - 1, 16) * lane_in * 2        # bf16 input window
    out_tile = row_tile * _round_up(W, 16) * lane_out * 2         # bf16 output tile
    m_rows = _round_up(row_tile * W, 16)
    patches = m_rows * _round_up(K * Cin, 128) * 2                # one kh im2col slab
    acc = m_rows * lane_out * 4                                   # f32 accumulator
    weights = 2 * K * _round_up(K * Cin, 16) * lane_out * 2       # double-buffered
    affine = 2 * 2 * 8 * lane_out * 4                             # scale + bias blocks
    return 2 * (in_tile + out_tile) + patches + acc + weights + affine


def _choose_row_tile(N, H, W, Cin, Cout, K, budget_bytes):
    fitting = [d for d in range(1, H + 1)
               if H % d == 0
               and _tile_footprint_bytes(d, W, Cin, Cout, K) <= budget_bytes]
    if not fitting:
        return 1
    if N == 1:
        # Keep >= 2 grid steps so both v7x TensorCores can be used.
        multi = [d for d in fitting if H // d >= 2]
        if multi:
            fitting = multi
    aligned = [d for d in fitting if (d * W) % 256 == 0]          # fill MXU M dim
    return max(aligned) if aligned else max(fitting)


def conv_bn_relu_nhwc(x_nhwc, weight_oihw, conv_bias, gamma, beta,
                      running_mean, running_var, eps=1e-5,
                      *, compute_dtype=jnp.bfloat16, row_tile=None):
    """Conv2d(3x3, s=1, p=1) + BatchNorm2d (eval stats) + ReLU. NHWC in/out.

    This is the intended in-model entry point: keep activations NHWC across
    the whole MixMobileBlock and convert NCHW<->NHWC once at the model edge.
    """
    N, H, W, Cin = x_nhwc.shape
    Cout, _, K, _ = weight_oihw.shape
    assert K == 3, "this kernel implements kernel_size=3, stride=1, padding=1"

    f32 = jnp.float32
    scale = (gamma / jnp.sqrt(running_var + eps)).astype(f32)
    bias = (beta - running_mean * scale).astype(f32)
    if conv_bias is not None:
        bias = bias + conv_bias.astype(f32) * scale

    # (Cout, Cin, KH, KW) -> (KH, KW*Cin, Cout), bf16, unscaled.
    w_mat = jnp.transpose(weight_oihw, (2, 3, 1, 0)).reshape(K, K * Cin, Cout)
    w_mat = w_mat.astype(compute_dtype)
    scale2d = scale.reshape(1, Cout)
    bias2d = bias.reshape(1, Cout)

    # Spatial zero pad by K//2 = 1, NHWC, bf16.
    x_pad = jnp.pad(x_nhwc.astype(compute_dtype), ((0, 0), (1, 1), (1, 1), (0, 0)))

    vmem_cap = _vmem_capacity_bytes()
    budget_bytes = (3 * vmem_cap) // 8          # ~24 MiB v7x, ~48 MiB v5e/v6e
    vmem_limit = min((3 * vmem_cap) // 4, 96 * 1024 * 1024)

    if row_tile is None:
        row_tile = _choose_row_tile(N, H, W, Cin, Cout, K, budget_bytes)
    assert H % row_tile == 0, "row_tile must divide H"
    n_tiles = H // row_tile
    trp = row_tile + K - 1

    kernel = functools.partial(_conv_bn_relu_kernel, kernel_size=K)
    grid = (N, n_tiles)
    w_spec = pl.BlockSpec((K, K * Cin, Cout), lambda b, i: (0, 0, 0))
    aff_spec = pl.BlockSpec((1, Cout), lambda b, i: (0, 0))
    o_spec = pl.BlockSpec((1, row_tile, W, Cout), lambda b, i: (b, i, 0, 0))
    params = pltpu.CompilerParams(
        dimension_semantics=("parallel", "parallel"),
        vmem_limit_bytes=int(vmem_limit))

    def run(x_arg, x_spec):
        out = pl.pallas_call(
            kernel,
            out_shape=jax.ShapeDtypeStruct((N, H, W, Cout), compute_dtype),
            grid=grid,
            in_specs=[x_spec, w_spec, aff_spec, aff_spec],
            out_specs=o_spec,
            compiler_params=params,
        )(x_arg, w_mat, scale2d, bias2d)
        return jax.block_until_ready(out)

    try:
        # Preferred: express the 2-row halo directly in the input BlockSpec.
        # The row dim is element-indexed (window of trp rows starting at
        # element offset i*row_tile), so overlapping windows are DMA'd
        # straight from the single padded HBM array — no wrapper-side copy.
        x_spec = pl.BlockSpec(
            (1, pl.Element(trp), W + K - 1, Cin),
            lambda b, i: (b, i * row_tile, 0, 0))
        return run(x_pad, x_spec)
    except Exception:
        # Fallback for jax builds without element-indexed BlockSpecs: gather
        # the overlapping row windows in the wrapper (one extra HBM pass).
        x_tiles = jnp.stack(
            [lax.dynamic_slice_in_dim(x_pad, i * row_tile, trp, axis=1)
             for i in range(n_tiles)], axis=1)       # (N, n_tiles, trp, W+2, Cin)
        x_spec = pl.BlockSpec((1, 1, trp, W + K - 1, Cin),
                              lambda b, i: (b, i, 0, 0, 0))
        return run(x_tiles, x_spec)


def conv_bn_relu_forward(x_nchw, weight_oihw, conv_bias, gamma, beta,
                         running_mean, running_var, eps=1e-5,
                         *, compute_dtype=jnp.bfloat16, row_tile=None):
    """NCHW in / NCHW out (f32), mirroring the PyTorch module's interface.

    The NCHW<->NHWC transposes here are boundary adapters only; inside a full
    MixMobileNet call conv_bn_relu_nhwc directly and stay NHWC throughout.
    """
    x_nhwc = jnp.transpose(x_nchw, (0, 2, 3, 1))
    out = conv_bn_relu_nhwc(x_nhwc, weight_oihw, conv_bias, gamma, beta,
                            running_mean, running_var, eps,
                            compute_dtype=compute_dtype, row_tile=row_tile)
    return jnp.transpose(out, (0, 3, 1, 2)).astype(jnp.float32)


def _reference(x_nchw, weight_oihw, conv_bias, gamma, beta,
               running_mean, running_var, eps=1e-5,
               compute_dtype=jnp.bfloat16):
    """Same math (bf16-quantized x/w, f32 conv + BN epilogue) via XLA conv."""
    scale = gamma / jnp.sqrt(running_var + eps)
    bias = beta - running_mean * scale
    if conv_bias is not None:
        bias = bias + conv_bias * scale
    xq = x_nchw.astype(compute_dtype).astype(jnp.float32)
    wq = weight_oihw.astype(compute_dtype).astype(jnp.float32)
    y = lax.conv_general_dilated(xq, wq, window_strides=(1, 1),
                                 padding=((1, 1), (1, 1)),
                                 dimension_numbers=("NCHW", "OIHW", "NCHW"))
    y = y * scale[None, :, None, None] + bias[None, :, None, None]
    return jnp.maximum(y, 0.0)


if __name__ == "__main__":
    key = jax.random.PRNGKey(0)
    k1, k2, k3, k4, k5, k6, k7 = jax.random.split(key, 7)

    N, Cin, H, W = 2, 4, 16, 16
    Cout, K = 8, 3

    x = jax.random.normal(k1, (N, Cin, H, W), jnp.float32)
    weight = jax.random.normal(k2, (Cout, Cin, K, K), jnp.float32) * 0.1
    conv_bias = jax.random.normal(k3, (Cout,), jnp.float32) * 0.1
    gamma = 1.0 + 0.1 * jax.random.normal(k4, (Cout,), jnp.float32)
    beta = 0.1 * jax.random.normal(k5, (Cout,), jnp.float32)
    running_mean = 0.1 * jax.random.normal(k6, (Cout,), jnp.float32)
    running_var = jnp.abs(1.0 + 0.1 * jax.random.normal(k7, (Cout,), jnp.float32))

    out = conv_bn_relu_forward(x, weight, conv_bias, gamma, beta,
                               running_mean, running_var)
    out = jax.block_until_ready(out)
    ref = _reference(x, weight, conv_bias, gamma, beta,
                     running_mean, running_var)
    assert out.shape == (N, Cout, H, W)
    assert jnp.allclose(out, ref, atol=2e-2, rtol=2e-2), "mismatch vs reference"

    # Multi-row-tile path: 4 halo'd row windows over one image (grid (1, 4)),
    # Cout not a multiple of 8 (masked lane stores) and conv bias disabled.
    kk = jax.random.split(jax.random.PRNGKey(1), 6)
    N2, Cin2, H2, W2, Cout2 = 1, 3, 32, 16, 5
    x2 = jax.random.normal(kk[0], (N2, Cin2, H2, W2), jnp.float32)
    w2 = jax.random.normal(kk[1], (Cout2, Cin2, K, K), jnp.float32) * 0.1
    g2 = 1.0 + 0.1 * jax.random.normal(kk[2], (Cout2,), jnp.float32)
    be2 = 0.1 * jax.random.normal(kk[3], (Cout2,), jnp.float32)
    rm2 = 0.1 * jax.random.normal(kk[4], (Cout2,), jnp.float32)
    rv2 = jnp.abs(1.0 + 0.1 * jax.random.normal(kk[5], (Cout2,), jnp.float32))

    out2 = jax.block_until_ready(
        conv_bn_relu_forward(x2, w2, None, g2, be2, rm2, rv2, row_tile=8))
    ref2 = _reference(x2, w2, None, g2, be2, rm2, rv2)
    assert out2.shape == (N2, Cout2, H2, W2)
    assert jnp.allclose(out2, ref2, atol=2e-2, rtol=2e-2), "mismatch (tiled path)"

    print("KERNEL_OK")
</pallas_src>

<mosaic_0001>
module attributes {stable_mosaic.version = 11 : i64} {
  func.func @_conv_bn_relu_kernel(%arg0: i32, %arg1: i32, %arg2: memref<1x1x18x18x4xbf16, #tpu.memory_space<vmem>>, %arg3: memref<3x12x8xbf16, #tpu.memory_space<vmem>>, %arg4: memref<1x8xf32, #tpu.memory_space<vmem>>, %arg5: memref<1x8xf32, #tpu.memory_space<vmem>>, %arg6: memref<1x16x16x8xbf16, #tpu.memory_space<vmem>>) attributes {dimension_semantics = [#tpu.dimension_semantics<parallel>, #tpu.dimension_semantics<parallel>], iteration_bounds = array<i64: 2, 1>, scalar_prefetch = 0 : i64, scratch_operands = 0 : i64, tpu.core_type = #tpu.core_type<tc>, window_params = [{transform_indices = @transform_0, window_bounds = array<i64: 1, 1, 18, 18, 4>}, {pipeline_mode = #tpu.pipeline_mode<synchronous>, transform_indices = @transform_1, window_bounds = array<i64: 3, 12, 8>}, {pipeline_mode = #tpu.pipeline_mode<synchronous>, transform_indices = @transform_2, window_bounds = array<i64: 1, 8>}, {pipeline_mode = #tpu.pipeline_mode<synchronous>, transform_indices = @transform_3, window_bounds = array<i64: 1, 8>}, {transform_indices = @transform_4, window_bounds = array<i64: 1, 16, 16, 8>}]} {
    %c0 = arith.constant 0 : index
    %c0_0 = arith.constant 0 : index
    %c0_1 = arith.constant 0 : index
    %c0_2 = arith.constant 0 : index
    %c0_3 = arith.constant 0 : index
    %0 = vector.load %arg2[%c0, %c0_0, %c0_1, %c0_2, %c0_3] : memref<1x1x18x18x4xbf16, #tpu.memory_space<vmem>>, vector<1x1x18x18x4xbf16>
    %1 = vector.shape_cast %0 : vector<1x1x18x18x4xbf16> to vector<18x18x4xbf16>
    %2 = vector.extract_strided_slice %1 {offsets = [0, 0, 0], sizes = [16, 18, 4], strides = [1, 1, 1]} : vector<18x18x4xbf16> to vector<16x18x4xbf16>
    %3 = vector.extract_strided_slice %2 {offsets = [0, 0, 0], sizes = [16, 16, 4], strides = [1, 1, 1]} : vector<16x18x4xbf16> to vector<16x16x4xbf16>
    %4 = vector.extract_strided_slice %2 {offsets = [0, 1, 0], sizes = [16, 16, 4], strides = [1, 1, 1]} : vector<16x18x4xbf16> to vector<16x16x4xbf16>
    %5 = vector.extract_strided_slice %2 {offsets = [0, 2, 0], sizes = [16, 16, 4], strides = [1, 1, 1]} : vector<16x18x4xbf16> to vector<16x16x4xbf16>
    %6 = tpu.concatenate %3, %4, %5 in 2 : vector<16x16x4xbf16>, vector<16x16x4xbf16>, vector<16x16x4xbf16> -> vector<16x16x12xbf16>
    %7 = vector.shape_cast %6 : vector<16x16x12xbf16> to vector<256x12xbf16>
    %c0_4 = arith.constant 0 : index
    %c0_5 = arith.constant 0 : index
    %c0_6 = arith.constant 0 : index
    %8 = vector.load %arg3[%c0_4, %c0_5, %c0_6] : memref<3x12x8xbf16, #tpu.memory_space<vmem>>, vector<1x12x8xbf16>
    %9 = vector.shape_cast %8 : vector<1x12x8xbf16> to vector<12x8xbf16>
    %cst = arith.constant dense<0.000000e+00> : vector<256x8xf32>
    %10 = tpu.matmul %7, %9, %cst {dimension_numbers = #tpu.dot_dimension_numbers<[1], [0], [0], [1], [0, 0, 1, 1], [], []>} : vector<256x12xbf16>, vector<12x8xbf16>, vector<256x8xf32> -> vector<256x8xf32>
    %11 = vector.extract_strided_slice %1 {offsets = [1, 0, 0], sizes = [16, 18, 4], strides = [1, 1, 1]} : vector<18x18x4xbf16> to vector<16x18x4xbf16>
    %12 = vector.extract_strided_slice %11 {offsets = [0, 0, 0], sizes = [16, 16, 4], strides = [1, 1, 1]} : vector<16x18x4xbf16> to vector<16x16x4xbf16>
    %13 = vector.extract_strided_slice %11 {offsets = [0, 1, 0], sizes = [16, 16, 4], strides = [1, 1, 1]} : vector<16x18x4xbf16> to vector<16x16x4xbf16>
    %14 = vector.extract_strided_slice %11 {offsets = [0, 2, 0], sizes = [16, 16, 4], strides = [1, 1, 1]} : vector<16x18x4xbf16> to vector<16x16x4xbf16>
    %15 = tpu.concatenate %12, %13, %14 in 2 : vector<16x16x4xbf16>, vector<16x16x4xbf16>, vector<16x16x4xbf16> -> vector<16x16x12xbf16>
    %16 = vector.shape_cast %15 : vector<16x16x12xbf16> to vector<256x12xbf16>
    %c1 = arith.constant 1 : index
    %c0_7 = arith.constant 0 : index
    %c0_8 = arith.constant 0 : index
    %17 = vector.load %arg3[%c1, %c0_7, %c0_8] : memref<3x12x8xbf16, #tpu.memory_space<vmem>>, vector<1x12x8xbf16>
    %18 = vector.shape_cast %17 : vector<1x12x8xbf16> to vector<12x8xbf16>
    %cst_9 = arith.constant dense<0.000000e+00> : vector<256x8xf32>
    %19 = tpu.matmul %16, %18, %cst_9 {dimension_numbers = #tpu.dot_dimension_numbers<[1], [0], [0], [1], [0, 0, 1, 1], [], []>} : vector<256x12xbf16>, vector<12x8xbf16>, vector<256x8xf32> -> vector<256x8xf32>
    %20 = arith.addf %10, %19 : vector<256x8xf32>
    %21 = vector.extract_strided_slice %1 {offsets = [2, 0, 0], sizes = [16, 18, 4], strides = [1, 1, 1]} : vector<18x18x4xbf16> to vector<16x18x4xbf16>
    %22 = vector.extract_strided_slice %21 {offsets = [0, 0, 0], sizes = [16, 16, 4], strides = [1, 1, 1]} : vector<16x18x4xbf16> to vector<16x16x4xbf16>
    %23 = vector.extract_strided_slice %21 {offsets = [0, 1, 0], sizes = [16, 16, 4], strides = [1, 1, 1]} : vector<16x18x4xbf16> to vector<16x16x4xbf16>
    %24 = vector.extract_strided_slice %21 {offsets = [0, 2, 0], sizes = [16, 16, 4], strides = [1, 1, 1]} : vector<16x18x4xbf16> to vector<16x16x4xbf16>
    %25 = tpu.concatenate %22, %23, %24 in 2 : vector<16x16x4xbf16>, vector<16x16x4xbf16>, vector<16x16x4xbf16> -> vector<16x16x12xbf16>
    %26 = vector.shape_cast %25 : vector<16x16x12xbf16> to vector<256x12xbf16>
    %c2 = arith.constant 2 : index
    %c0_10 = arith.constant 0 : index
    %c0_11 = arith.constant 0 : index
    %27 = vector.load %arg3[%c2, %c0_10, %c0_11] : memref<3x12x8xbf16, #tpu.memory_space<vmem>>, vector<1x12x8xbf16>
    %28 = vector.shape_cast %27 : vector<1x12x8xbf16> to vector<12x8xbf16>
    %cst_12 = arith.constant dense<0.000000e+00> : vector<256x8xf32>
    %29 = tpu.matmul %26, %28, %cst_12 {dimension_numbers = #tpu.dot_dimension_numbers<[1], [0], [0], [1], [0, 0, 1, 1], [], []>} : vector<256x12xbf16>, vector<12x8xbf16>, vector<256x8xf32> -> vector<256x8xf32>
    %30 = arith.addf %20, %29 : vector<256x8xf32>
    %c0_13 = arith.constant 0 : index
    %c0_14 = arith.constant 0 : index
    %31 = vector.load %arg4[%c0_13, %c0_14] : memref<1x8xf32, #tpu.memory_space<vmem>>, vector<1x8xf32>
    %32 = vector.broadcast %31 : vector<1x8xf32> to vector<256x8xf32>
    %33 = arith.mulf %30, %32 : vector<256x8xf32>
    %c0_15 = arith.constant 0 : index
    %c0_16 = arith.constant 0 : index
    %34 = vector.load %arg5[%c0_15, %c0_16] : memref<1x8xf32, #tpu.memory_space<vmem>>, vector<1x8xf32>
    %35 = vector.broadcast %34 : vector<1x8xf32> to vector<256x8xf32>
    %36 = arith.addf %33, %35 : vector<256x8xf32>
    %cst_17 = arith.constant 0.000000e+00 : f32
    %37 = vector.broadcast %cst_17 : f32 to vector<256x8xf32>
    %38 = arith.maximumf %36, %37 : vector<256x8xf32>
    %39 = vector.shape_cast %38 : vector<256x8xf32> to vector<16x16x8xf32>
    %40 = arith.truncf %39 : vector<16x16x8xf32> to vector<16x16x8xbf16>
    %c0_18 = arith.constant 0 : index
    %c0_19 = arith.constant 0 : index
    %c0_20 = arith.constant 0 : index
    %c0_21 = arith.constant 0 : index
    %41 = vector.load %arg6[%c0_18, %c0_19, %c0_20, %c0_21] : memref<1x16x16x8xbf16, #tpu.memory_space<vmem>>, vector<1x16x16x8xbf16>
    %42 = vector.shape_cast %41 : vector<1x16x16x8xbf16> to vector<16x16x8xbf16>
    %43 = vector.shape_cast %40 : vector<16x16x8xbf16> to vector<1x16x16x8xbf16>
    tpu.vector_store %arg6[%c0_18, %c0_19, %c0_20, %c0_21], %43 {strides = array<i32>} : memref<1x16x16x8xbf16, #tpu.memory_space<vmem>>, vector<1x16x16x8xbf16>,
    return
  }
  func.func @transform_0(%arg0: i32, %arg1: i32) -> (i32, i32, i32, i32, i32) {
    %c0_i32 = arith.constant 0 : i32
    %c0_i32_0 = arith.constant 0 : i32
    %c0_i32_1 = arith.constant 0 : i32
    %c0_i32_2 = arith.constant 0 : i32
    return %arg0, %arg1, %c0_i32, %c0_i32_0, %c0_i32_1 : i32, i32, i32, i32, i32
  }
  func.func @transform_1(%arg0: i32, %arg1: i32) -> (i32, i32, i32) {
    %c0_i32 = arith.constant 0 : i32
    %c0_i32_0 = arith.constant 0 : i32
    %c0_i32_1 = arith.constant 0 : i32
    %c0_i32_2 = arith.constant 0 : i32
    return %c0_i32, %c0_i32_0, %c0_i32_1 : i32, i32, i32
  }
  func.func @transform_2(%arg0: i32, %arg1: i32) -> (i32, i32) {
    %c0_i32 = arith.constant 0 : i32
    %c0_i32_0 = arith.constant 0 : i32
    %c0_i32_1 = arith.constant 0 : i32
    return %c0_i32, %c0_i32_0 : i32, i32
  }
  func.func @transform_3(%arg0: i32, %arg1: i32) -> (i32, i32) {
    %c0_i32 = arith.constant 0 : i32
    %c0_i32_0 = arith.constant 0 : i32
    %c0_i32_1 = arith.constant 0 : i32
    return %c0_i32, %c0_i32_0 : i32, i32
  }
  func.func @transform_4(%arg0: i32, %arg1: i32) -> (i32, i32, i32, i32) {
    %c0_i32 = arith.constant 0 : i32
    %c0_i32_0 = arith.constant 0 : i32
    %c0_i32_1 = arith.constant 0 : i32
    return %arg0, %arg1, %c0_i32, %c0_i32_0 : i32, i32, i32, i32
  }
}

</mosaic_0001>

<llo_original>
// kernel: tpu_custom_call.1
$region0: #{tpu_custom_call.1}
  #allocation0 [shape = 'u32[]', space=smem, size = 0x4, offset = 0x4, fixed_abs, tag = 'smem constant byte address 0x4 - core index']
  #allocation1 [shape = 'u32[144,128]{1,0:T(1,128)}', space=vmem, size = 0x12000, scoped, tag = 'internal scratch']
  %s0 = inlined_call_operand.vmem [shape: bf16[2,1,18,18,4], index: 0, kind: input, shape index: {}]
  %s1 = inlined_call_operand.vmem [shape: bf16[3,12,8], index: 1, kind: input, shape index: {}]
  %s2 = inlined_call_operand.vmem [shape: f32[1,8], index: 2, kind: input, shape index: {}]
  %s3 = inlined_call_operand.vmem [shape: f32[1,8], index: 3, kind: input, shape index: {}]
  %s4 = inlined_call_operand.vmem [shape: bf16[2,16,16,8], index: 4, kind: output, shape index: {}]
  %s5 = sld [smem:[#allocation0]]
  $region49: #{tpu_custom_call.1} parent=0
    _
  %s7 = ssub.s32 1, %s5
  %s8 = scalar_select 0, %s7, %s5
  loop: start=0, step=1, limit=4
  $region2: #{tpu_custom_call.1} parent=0 // loop_pre_header
    _
  $region3: #{tpu_custom_call.1} parent=0 // loop_header
    %s10 = sphi 0, %s14
    %p11 = scmp.ge.s32.totalorder %s10, 4
    %s17 = sphi 0, %s29
    %s18 = sphi 0, %s25
    %s19 = sphi 0, %s17
    %s20 = sphi 0, %s18
    %s21 = sphi 0, %s19
    %s22 = sphi 0, %s20
    %s34 = sphi 0, %s36
    %s37 = sphi 0, %s34
    %s38 = sphi 0, %s37
    %s54 = sphi 0, %s38
    %s58 = sphi 0, %s58
    %s60 = sphi 0, %s58
    %s61 = sphi 0, %s60
    %s75 = sphi 0, %s61
    %s79 = sphi 0, %s79
    %s81 = sphi 0, %s79
    %s82 = sphi 0, %s81
    %s96 = sphi 0, %s82
    %s100 = sphi 0, %s100
    %s102 = sphi 0, %s100
    %s103 = sphi 0, %s102
    %s117 = sphi 0, %s103
    %s125 = sphi 0, %s127
    %s128 = sphi 0, %s125
    %s129 = sphi 0, %s128
    %s145 = sphi 0, %s129
  $region4: #{tpu_custom_call.1} parent=0 // loop_header_branch
    %13 = sbr.rel (%p11) target = $region8
  $region5: #{tpu_custom_call.1} parent=0 // loop_body
    %s15 = ssub.s32 %s10, 1
    %s16 = ssub.s32 %s10, 2
    %s23 = sadd.s32 1, %s18
    %p24 = scmp.ge.s32.totalorder %s23, 1
    %s25 = scalar_select %p24, 0, %s23
    %s26 = sadd.s32 1, %s17
    %s27 = scalar_select %p24, %s26, %s17
    %p28 = scmp.ge.s32.totalorder %s27, 2
    %s29 = scalar_select %p28, 0, %s27
    %s30 = ssub.s32 %s17, %s29
    %s31 = ssub.s32 %s18, %s25
    %s32 = sor.u32 %s30, %s31
    %p33 = scmp.eq.s32.totalorder %s32, 0
    %s35 = sadd.s32 %s34, 1
    %s36 = scalar_select %p33, %s34, %s35
    %p39 = pneg %p33
    %p40 = scmp.eq.s32.totalorder %s10, 1
    %p41 = por %p39, %p40
    %p42 = scmp.ne.s32.totalorder %s34, %s37
    %p43 = scmp.eq.s32.totalorder %s10, 0
    %p44 = por %p42, %p43
    %p45 = scmp.ne.s32.totalorder %s34, %s37
    %p46 = scmp.eq.s32.totalorder %s15, 1
    %p47 = por %p45, %p46
    %p48 = scmp.ne.s32.totalorder %s37, %s38
    %p49 = scmp.eq.s32.totalorder %s15, 0
    %p50 = por %p48, %p49
    %p51 = scmp.ne.s32.totalorder %s37, %s38
    %p52 = scmp.eq.s32.totalorder %s16, 1
    %p53 = por %p51, %p52
    %p55 = scmp.ne.s32.totalorder %s38, %s54
    %p56 = scmp.eq.s32.totalorder %s16, 0
    %p57 = por %p55, %p56
    %s59 = sadd.s32 %s58, 1
    %p62 = scmp.eq.s32.totalorder %s10, 1
    %p63 = scmp.ne.s32.totalorder %s58, %s60
    %p64 = scmp.eq.s32.totalorder %s10, 0
    %p65 = por %p63, %p64
    %p66 = scmp.ne.s32.totalorder %s58, %s60
    %p67 = scmp.eq.s32.totalorder %s15, 1
    %p68 = por %p66, %p67
    %p69 = scmp.ne.s32.totalorder %s60, %s61
    %p70 = scmp.eq.s32.totalorder %s15, 0
    %p71 = por %p69, %p70
    %p72 = scmp.ne.s32.totalorder %s60, %s61
    %p73 = scmp.eq.s32.totalorder %s16, 1
    %p74 = por %p72, %p73
    %p76 = scmp.ne.s32.totalorder %s61, %s75
    %p77 = scmp.eq.s32.totalorder %s16, 0
    %p78 = por %p76, %p77
    %s80 = sadd.s32 %s79, 1
    %p83 = scmp.eq.s32.totalorder %s10, 1
    %p84 = scmp.ne.s32.totalorder %s79, %s81
    %p85 = scmp.eq.s32.totalorder %s10, 0
    %p86 = por %p84, %p85
    %p87 = scmp.ne.s32.totalorder %s79, %s81
    %p88 = scmp.eq.s32.totalorder %s15, 1
    %p89 = por %p87, %p88
    %p90 = scmp.ne.s32.totalorder %s81, %s82
    %p91 = scmp.eq.s32.totalorder %s15, 0
    %p92 = por %p90, %p91
    %p93 = scmp.ne.s32.totalorder %s81, %s82
    %p94 = scmp.eq.s32.totalorder %s16, 1
    %p95 = por %p93, %p94
    %p97 = scmp.ne.s32.totalorder %s82, %s96
    %p98 = scmp.eq.s32.totalorder %s16, 0
    %p99 = por %p97, %p98
    %s101 = sadd.s32 %s100, 1
    %p104 = scmp.eq.s32.totalorder %s10, 1
    %p105 = scmp.ne.s32.totalorder %s100, %s102
    %p106 = scmp.eq.s32.totalorder %s10, 0
    %p107 = por %p105, %p106
    %p108 = scmp.ne.s32.totalorder %s100, %s102
    %p109 = scmp.eq.s32.totalorder %s15, 1
    %p110 = por %p108, %p109
    %p111 = scmp.ne.s32.totalorder %s102, %s103
    %p112 = scmp.eq.s32.totalorder %s15, 0
    %p113 = por %p111, %p112
    %p114 = scmp.ne.s32.totalorder %s102, %s103
    %p115 = scmp.eq.s32.totalorder %s16, 1
    %p116 = por %p114, %p115
    %p118 = scmp.ne.s32.totalorder %s103, %s117
    %p119 = scmp.eq.s32.totalorder %s16, 0
    %p120 = por %p118, %p119
    %s121 = ssub.s32 %s17, %s29
    %s122 = ssub.s32 %s18, %s25
    %s123 = sor.u32 %s121, %s122
    %p124 = scmp.eq.s32.totalorder %s123, 0
    %s126 = sadd.s32 %s125, 1
    %s127 = scalar_select %p124, %s125, %s126
    %p130 = pneg %p124
    %p131 = scmp.eq.s32.totalorder %s10, 1
    %p132 = por %p130, %p131
    %p133 = scmp.ne.s32.totalorder %s125, %s128
    %p134 = scmp.eq.s32.totalorder %s10, 0
    %p135 = por %p133, %p134
    %p136 = scmp.ne.s32.totalorder %s125, %s128
    %p137 = scmp.eq.s32.totalorder %s15, 1
    %p138 = por %p136, %p137
    %p139 = scmp.ne.s32.totalorder %s128, %s129
    %p140 = scmp.eq.s32.totalorder %s15, 0
    %p141 = por %p139, %p140
    %p142 = scmp.ne.s32.totalorder %s128, %s129
    %p143 = scmp.eq.s32.totalorder %s16, 1
    %p144 = por %p142, %p143
    %p146 = scmp.ne.s32.totalorder %s129, %s145
    %p147 = scmp.eq.s32.totalorder %s16, 0
    %p148 = por %p146, %p147
    %p149 = scmp.le.s32.totalorder 1, %s10
    %p150 = scmp.lt.s32.totalorder %s10, 3
    %p151 = pnand %p149, %p150
    %p152 = pneg %p151
    // Predicated region
    $region9: #{tpu_custom_call.1} parent=5 // pred_check
      _
    $region10: #{tpu_custom_call.1} parent=5 // pred_check_branch
      %154 = sbr.rel (%p151) target = $region12
    $region11: #{tpu_custom_call.1} parent=5 // pred_region
      %s155 = ssub.s32 %s10, 1
      // Predicated region
      $region13: #{tpu_custom_call.1} parent=11 // pred_check
        %p156 = pneg %p71
      $region14: #{tpu_custom_call.1} parent=11 // pred_check_branch
        %158 = sbr.rel (%p156) target = $region16
      $region15: #{tpu_custom_call.1} parent=11 // pred_region
        _
      $region16: #{tpu_custom_call.1} parent=11 // pred_fallthru
        _
      // Predicated region
      $region17: #{tpu_custom_call.1} parent=11 // pred_check
        %p159 = pneg %p92
      $region18: #{tpu_custom_call.1} parent=11 // pred_check_branch
        %161 = sbr.rel (%p159) target = $region20
      $region19: #{tpu_custom_call.1} parent=11 // pred_region
        _
      $region20: #{tpu_custom_call.1} parent=11 // pred_fallthru
        _
      // Predicated region
      $region21: #{tpu_custom_call.1} parent=11 // pred_check
        %p162 = pneg %p113
      $region22: #{tpu_custom_call.1} parent=11 // pred_check_branch
        %164 = sbr.rel (%p162) target = $region24
      $region23: #{tpu_custom_call.1} parent=11 // pred_region
        _
      $region24: #{tpu_custom_call.1} parent=11 // pred_fallthru
        _
    $region12: #{tpu_custom_call.1} parent=5 // pred_fallthru
      _
    %p165 = scmp.lt.s32.totalorder %s10, 2
    // Predicated region
    $region25: #{tpu_custom_call.1} parent=5 // pred_check
      %p166 = pneg %p165
    $region26: #{tpu_custom_call.1} parent=5 // pred_check_branch
      %168 = sbr.rel (%p166) target = $region28
    $region27: #{tpu_custom_call.1} parent=5 // pred_region
      // Predicated region
      $region29: #{tpu_custom_call.1} parent=27 // pred_check
        %p169 = pneg %p44
      $region30: #{tpu_custom_call.1} parent=27 // pred_check_branch
        %171 = sbr.rel (%p169) target = $region32
      $region31: #{tpu_custom_call.1} parent=27 // pred_region
        %p172 = scmp.lt.s32.totalorder %s17, 1
        %s173 = scalar_select %p172, %s17, 1
        %p174 = scmp.lt.s32.totalorder %s18, 0
        %s175 = scalar_select %p174, %s18, 0
        %s176 = smul.addr %s175, 54
        %s177 = smul.addr %s173, 54
        %s178 = sadd.s32 %s176, %s177
        %s179 = smul.addr %s178, 4
        %s180 = scalar_lea.vmem %s0, %s179
      $region32: #{tpu_custom_call.1} parent=27 // pred_fallthru
        _
    $region28: #{tpu_custom_call.1} parent=5 // pred_fallthru
      _
    %p181 = scmp.le.s32.totalorder 1, %s10
    %p182 = scmp.lt.s32.totalorder %s10, 3
    %p183 = pnand %p181, %p182
    %p184 = pneg %p183
    // Predicated region
    $region33: #{tpu_custom_call.1} parent=5 // pred_check
      _
    $region34: #{tpu_custom_call.1} parent=5 // pred_check_branch
      %186 = sbr.rel (%p183) target = $region36
    $region35: #{tpu_custom_call.1} parent=5 // pred_region
      %s187 = ssub.s32 %s10, 1
      %p188 = scmp.lt.s32.totalorder %s19, 1
      %s189 = scalar_select %p188, %s19, 1
      %p190 = scmp.lt.s32.totalorder %s20, 0
      %s191 = scalar_select %p190, %s20, 0
      %s192 = smul.addr %s191, 54
      %s193 = smul.addr %s189, 54
      %s194 = sadd.s32 %s192, %s193
      %s195 = smul.addr %s194, 4
      %s196 = scalar_lea.vmem %s0, %s195
      %p197 = pneg %p50
      %p198 = pneg %p47
      %p199 = pneg %p71
      %p200 = pneg %p68
      %p201 = pneg %p92
      %p202 = pneg %p89
      %p203 = pneg %p113
      %p204 = pneg %p110
      %p205 = pneg %p141
      %p206 = pneg %p138
      %s207 = smul.u32 16, %s20
      %p208 = scmp.lt.s32.totalorder %s19, 1
      %s209 = scalar_select %p208, %s19, 1
      %p210 = scmp.lt.s32.totalorder %s207, 15
      %s211 = scalar_select %p210, %s207, 15
      %s212 = smul.addr %s211, 2
      %s213 = smul.addr %s209, 32
      %s214 = sadd.s32 %s212, %s213
      %s215 = smul.addr %s214, 4
      %s216 = scalar_lea.vmem %s4, %s215
      %p217 = scmp.lt.s32.totalorder %s19, 1
      %s218 = scalar_select %p217, %s19, 1
      %p219 = scmp.lt.s32.totalorder %s20, 0
      %s220 = scalar_select %p219, %s20, 0
      %s221 = smul.addr %s220, 54
      %s222 = smul.addr %s218, 54
      %s223 = sadd.s32 %s221, %s222
      %s224 = smul.addr %s223, 4
      %s225 = scalar_lea.vmem %s0, %s224
      %s226 = smul.u32 16, %s20
      %p227 = scmp.lt.s32.totalorder %s19, 1
      %s228 = scalar_select %p227, %s19, 1
      %p229 = scmp.lt.s32.totalorder %s226, 15
      %s230 = scalar_select %p229, %s226, 15
      %s231 = smul.addr %s230, 2
      %s232 = smul.addr %s228, 32
      %s233 = sadd.s32 %s231, %s232
      %s234 = smul.addr %s233, 4
      %s235 = scalar_lea.vmem %s4, %s234
      %s236 = smul.u32 16, %s20
      %v238 = vld [vmem:[%s225] sm:$0xf]
      %v239 = vld [vmem:[%s225 + $0x4] sm:$0xf]
      %v240 = vld [vmem:[%s225 + $0x8] sm:$0x1]
      %v241 = vld [vmem:[%s225 + $0xc] sm:$0xf]
      %v242 = vld [vmem:[%s225 + $0x10] sm:$0xf]
      %v243 = vld [vmem:[%s225 + $0x14] sm:$0x1]
      %v244 = vld [vmem:[%s225 + $0x18] sm:$0xf]
      %v245 = vld [vmem:[%s225 + $0x1c] sm:$0xf]
      %v246 = vld [vmem:[%s225 + $0x20] sm:$0x1]
      %v247 = vld [vmem:[%s225 + $0x24] sm:$0xf]
      %v248 = vld [vmem:[%s225 + $0x28] sm:$0xf]
      %v249 = vld [vmem:[%s225 + $0x2c] sm:$0x1]
      %v250 = vld [vmem:[%s225 + $0x30] sm:$0xf]
      %v251 = vld [vmem:[%s225 + $0x34] sm:$0xf]
      %v252 = vld [vmem:[%s225 + $0x38] sm:$0x1]
      %v253 = vld [vmem:[%s225 + $0x3c] sm:$0xf]
      %v254 = vld [vmem:[%s225 + $0x40] sm:$0xf]
      %v255 = vld [vmem:[%s225 + $0x44] sm:$0x1]
      %v256 = vld [vmem:[%s225 + $0x48] sm:$0xf]
      %v257 = vld [vmem:[%s225 + $0x4c] sm:$0xf]
      %v258 = vld [vmem:[%s225 + $0x50] sm:$0x1]
      %v259 = vld [vmem:[%s225 + $0x54] sm:$0xf]
      %v260 = vld [vmem:[%s225 + $0x58] sm:$0xf]
      %v261 = vld [vmem:[%s225 + $0x5c] sm:$0x1]
      %v262 = vld [vmem:[%s225 + $0x60] sm:$0xf]
      %v263 = vld [vmem:[%s225 + $0x64] sm:$0xf]
      %v264 = vld [vmem:[%s225 + $0x68] sm:$0x1]
      %v265 = vld [vmem:[%s225 + $0x6c] sm:$0xf]
      %v266 = vld [vmem:[%s225 + $0x70] sm:$0xf]
      %v267 = vld [vmem:[%s225 + $0x74] sm:$0x1]
      %v268 = vld [vmem:[%s225 + $0x78] sm:$0xf]
      %v269 = vld [vmem:[%s225 + $0x7c] sm:$0xf]
      %v270 = vld [vmem:[%s225 + $0x80] sm:$0x1]
      %v271 = vld [vmem:[%s225 + $0x84] sm:$0xf]
      %v272 = vld [vmem:[%s225 + $0x88] sm:$0xf]
      %v273 = vld [vmem:[%s225 + $0x8c] sm:$0x1]
      %v274 = vld [vmem:[%s225 + $0x90] sm:$0xf]
      %v275 = vld [vmem:[%s225 + $0x94] sm:$0xf]
      %v276 = vld [vmem:[%s225 + $0x98] sm:$0x1]
      %v277 = vld [vmem:[%s225 + $0x9c] sm:$0xf]
      %v278 = vld [vmem:[%s225 + $0xa0] sm:$0xf]
      %v279 = vld [vmem:[%s225 + $0xa4] sm:$0x1]
      %v280 = vld [vmem:[%s225 + $0xa8] sm:$0xf]
      %v281 = vld [vmem:[%s225 + $0xac] sm:$0xf]
      %v282 = vld [vmem:[%s225 + $0xb0] sm:$0x1]
      %v283 = vld [vmem:[%s225 + $0xb4] sm:$0xf]
      %v284 = vld [vmem:[%s225 + $0xb8] sm:$0xf]
      %v285 = vld [vmem:[%s225 + $0xbc] sm:$0x1]
      %v286 = vld [vmem:[%s225 + $0xc0] sm:$0xf]
      %v287 = vld [vmem:[%s225 + $0xc4] sm:$0xf]
      %v288 = vld [vmem:[%s225 + $0xc8] sm:$0x1]
      %v289 = vld [vmem:[%s225 + $0xcc] sm:$0xf]
      %v290 = vld [vmem:[%s225 + $0xd0] sm:$0xf]
      %v291 = vld [vmem:[%s225 + $0xd4] sm:$0x1]
      %v324 = vunpack.c.l.b16 %v238
      %v325 = vunpack.c.l.b16 %v239
      %v326 = vunpack.c.l.b16 %v241
      %v327 = vunpack.c.l.b16 %v242
      %v328 = vunpack.c.l.b16 %v244
      %v329 = vunpack.c.l.b16 %v245
      %v330 = vunpack.c.l.b16 %v247
      %v331 = vunpack.c.l.b16 %v248
      %v332 = vunpack.c.l.b16 %v250
      %v333 = vunpack.c.l.b16 %v251
      %v334 = vunpack.c.l.b16 %v253
      %v335 = vunpack.c.l.b16 %v254
      %v336 = vunpack.c.l.b16 %v256
      %v337 = vunpack.c.l.b16 %v257
      %v338 = vunpack.c.l.b16 %v259
      %v339 = vunpack.c.l.b16 %v260
      %v340 = vunpack.c.l.b16 %v262
      %v341 = vunpack.c.l.b16 %v263
      %v342 = vunpack.c.l.b16 %v265
      %v343 = vunpack.c.l.b16 %v266
      %v344 = vunpack.c.l.b16 %v268
      %v345 = vunpack.c.l.b16 %v269
      %v346 = vunpack.c.l.b16 %v271
      %v347 = vunpack.c.l.b16 %v272
      %v348 = vunpack.c.l.b16 %v274
      %v349 = vunpack.c.l.b16 %v275
      %v350 = vunpack.c.l.b16 %v277
      %v351 = vunpack.c.l.b16 %v278
      %v352 = vunpack.c.l.b16 %v280
      %v353 = vunpack.c.l.b16 %v281
      %v354 = vunpack.c.l.b16 %v283
      %v355 = vunpack.c.l.b16 %v284
      %v356 = vpack.c.b16 %v325, %v324
      %v357 = vpack.c.b16 %v327, %v326
      %v358 = vpack.c.b16 %v329, %v328
      %v359 = vpack.c.b16 %v331, %v330
      %v360 = vpack.c.b16 %v333, %v332
      %v361 = vpack.c.b16 %v335, %v334
      %v362 = vpack.c.b16 %v337, %v336
      %v363 = vpack.c.b16 %v339, %v338
      %v364 = vpack.c.b16 %v341, %v340
      %v365 = vpack.c.b16 %v343, %v342
      %v366 = vpack.c.b16 %v345, %v344
      %v367 = vpack.c.b16 %v347, %v346
      %v368 = vpack.c.b16 %v349, %v348
      %v369 = vpack.c.b16 %v351, %v350
      %v370 = vpack.c.b16 %v353, %v352
      %v371 = vpack.c.b16 %v355, %v354
      %v388 = vunpack.c.l.b16 %v240
      %v389 = vunpack.c.l.b16 %v243
      %v390 = vunpack.c.l.b16 %v246
      %v391 = vunpack.c.l.b16 %v249
      %v392 = vunpack.c.l.b16 %v252
      %v393 = vunpack.c.l.b16 %v255
      %v394 = vunpack.c.l.b16 %v258
      %v395 = vunpack.c.l.b16 %v261
      %v396 = vunpack.c.l.b16 %v264
      %v397 = vunpack.c.l.b16 %v267
      %v398 = vunpack.c.l.b16 %v270
      %v399 = vunpack.c.l.b16 %v273
      %v400 = vunpack.c.l.b16 %v276
      %v401 = vunpack.c.l.b16 %v279
      %v402 = vunpack.c.l.b16 %v282
      %v403 = vunpack.c.l.b16 %v285
      %v404 = vpack.c.b16 %v388, %v388
      %v405 = vpack.c.b16 %v389, %v389
      %v406 = vpack.c.b16 %v390, %v390
      %v407 = vpack.c.b16 %v391, %v391
      %v408 = vpack.c.b16 %v392, %v392
      %v409 = vpack.c.b16 %v393, %v393
      %v410 = vpack.c.b16 %v394, %v394
      %v411 = vpack.c.b16 %v395, %v395
      %v412 = vpack.c.b16 %v396, %v396
      %v413 = vpack.c.b16 %v397, %v397
      %v414 = vpack.c.b16 %v398, %v398
      %v415 = vpack.c.b16 %v399, %v399
      %v416 = vpack.c.b16 %v400, %v400
      %v417 = vpack.c.b16 %v401, %v401
      %v418 = vpack.c.b16 %v402, %v402
      %v419 = vpack.c.b16 %v403, %v403
      %vm420 = vsmask.f32 7424
      %v422 = vshrl.u32 %v356, 16
      %v424 = vshll.u32 %v356, 16
      %v426 = vrot.slane %v424, 1
      %v427 = vor.u32 %v422, %v426
      %v429 = vshll.u32 %v404, 16
      %v431 = vrot.slane %v429, 1
      %v432 = vsel %vm420, %v427, %v431
      %v434 = vshrl.u32 %v357, 16
      %v436 = vshll.u32 %v357, 16
      %v438 = vrot.slane %v436, 1
      %v439 = vor.u32 %v434, %v438
      %v441 = vshll.u32 %v405, 16
      %v443 = vrot.slane %v441, 1
      %v444 = vsel %vm420, %v439, %v443
      %v446 = vshrl.u32 %v358, 16
      %v448 = vshll.u32 %v358, 16
      %v450 = vrot.slane %v448, 1
      %v451 = vor.u32 %v446, %v450
      %v453 = vshll.u32 %v406, 16
      %v455 = vrot.slane %v453, 1
      %v456 = vsel %vm420, %v451, %v455
      %v458 = vshrl.u32 %v359, 16
      %v460 = vshll.u32 %v359, 16
      %v462 = vrot.slane %v460, 1
      %v463 = vor.u32 %v458, %v462
      %v465 = vshll.u32 %v407, 16
      %v467 = vrot.slane %v465, 1
      %v468 = vsel %vm420, %v463, %v467
      %v470 = vshrl.u32 %v360, 16
      %v472 = vshll.u32 %v360, 16
      %v474 = vrot.slane %v472, 1
      %v475 = vor.u32 %v470, %v474
      %v477 = vshll.u32 %v408, 16
      %v479 = vrot.slane %v477, 1
      %v480 = vsel %vm420, %v475, %v479
      %v482 = vshrl.u32 %v361, 16
      %v484 = vshll.u32 %v361, 16
      %v486 = vrot.slane %v484, 1
      %v487 = vor.u32 %v482, %v486
      %v489 = vshll.u32 %v409, 16
      %v491 = vrot.slane %v489, 1
      %v492 = vsel %vm420, %v487, %v491
      %v494 = vshrl.u32 %v362, 16
      %v496 = vshll.u32 %v362, 16
      %v498 = vrot.slane %v496, 1
      %v499 = vor.u32 %v494, %v498
      %v501 = vshll.u32 %v410, 16
      %v503 = vrot.slane %v501, 1
      %v504 = vsel %vm420, %v499, %v503
      %v506 = vshrl.u32 %v363, 16
      %v508 = vshll.u32 %v363, 16
      %v510 = vrot.slane %v508, 1
      %v511 = vor.u32 %v506, %v510
      %v513 = vshll.u32 %v411, 16
      %v515 = vrot.slane %v513, 1
      %v516 = vsel %vm420, %v511, %v515
      %v518 = vshrl.u32 %v364, 16
      %v520 = vshll.u32 %v364, 16
      %v522 = vrot.slane %v520, 1
      %v523 = vor.u32 %v518, %v522
      %v525 = vshll.u32 %v412, 16
      %v527 = vrot.slane %v525, 1
      %v528 = vsel %vm420, %v523, %v527
      %v530 = vshrl.u32 %v365, 16
      %v532 = vshll.u32 %v365, 16
      %v534 = vrot.slane %v532, 1
      %v535 = vor.u32 %v530, %v534
      %v537 = vshll.u32 %v413, 16
      %v539 = vrot.slane %v537, 1
      %v540 = vsel %vm420, %v535, %v539
      %v542 = vshrl.u32 %v366, 16
      %v544 = vshll.u32 %v366, 16
      %v546 = vrot.slane %v544, 1
      %v547 = vor.u32 %v542, %v546
      %v549 = vshll.u32 %v414, 16
      %v551 = vrot.slane %v549, 1
      %v552 = vsel %vm420, %v547, %v551
      %v554 = vshrl.u32 %v367, 16
      %v556 = vshll.u32 %v367, 16
      %v558 = vrot.slane %v556, 1
      %v559 = vor.u32 %v554, %v558
      %v561 = vshll.u32 %v415, 16
      %v563 = vrot.slane %v561, 1
      %v564 = vsel %vm420, %v559, %v563
      %v566 = vshrl.u32 %v368, 16
      %v568 = vshll.u32 %v368, 16
      %v570 = vrot.slane %v568, 1
      %v571 = vor.u32 %v566, %v570
      %v573 = vshll.u32 %v416, 16
      %v575 = vrot.slane %v573, 1
      %v576 = vsel %vm420, %v571, %v575
      %v578 = vshrl.u32 %v369, 16
      %v580 = vshll.u32 %v369, 16
      %v582 = vrot.slane %v580, 1
      %v583 = vor.u32 %v578, %v582
      %v585 = vshll.u32 %v417, 16
      %v587 = vrot.slane %v585, 1
      %v588 = vsel %vm420, %v583, %v587
      %v590 = vshrl.u32 %v370, 16
      %v592 = vshll.u32 %v370, 16
      %v594 = vrot.slane %v592, 1
      %v595 = vor.u32 %v590, %v594
      %v597 = vshll.u32 %v418, 16
      %v599 = vrot.slane %v597, 1
      %v600 = vsel %vm420, %v595, %v599
      %v602 = vshrl.u32 %v371, 16
      %v604 = vshll.u32 %v371, 16
      %v606 = vrot.slane %v604, 1
      %v607 = vor.u32 %v602, %v606
      %v609 = vshll.u32 %v419, 16
      %v611 = vrot.slane %v609, 1
      %v612 = vsel %vm420, %v607, %v611
      %613 = vrot.lane.b32.xlu0 %v432, 4
      %v614 = vpop.permute.xlu0 %613
      %615 = vrot.lane.b32.xlu0 %v444, 4
      %v616 = vpop.permute.xlu0 %615
      %617 = vrot.lane.b32.xlu0 %v456, 4
      %v618 = vpop.permute.xlu0 %617
      %619 = vrot.lane.b32.xlu0 %v468, 4
      %v620 = vpop.permute.xlu0 %619
      %621 = vrot.lane.b32.xlu0 %v480, 4
      %v622 = vpop.permute.xlu0 %621
      %623 = vrot.lane.b32.xlu0 %v492, 4
      %v624 = vpop.permute.xlu0 %623
      %625 = vrot.lane.b32.xlu0 %v504, 4
      %v626 = vpop.permute.xlu0 %625
      %627 = vrot.lane.b32.xlu0 %v516, 4
      %v628 = vpop.permute.xlu0 %627
      %629 = vrot.lane.b32.xlu0 %v528, 4
      %v630 = vpop.permute.xlu0 %629
      %631 = vrot.lane.b32.xlu0 %v540, 4
      %v632 = vpop.permute.xlu0 %631
      %633 = vrot.lane.b32.xlu0 %v552, 4
      %v634 = vpop.permute.xlu0 %633
      %635 = vrot.lane.b32.xlu0 %v564, 4
      %v636 = vpop.permute.xlu0 %635
      %637 = vrot.lane.b32.xlu0 %v576, 4
      %v638 = vpop.permute.xlu0 %637
      %639 = vrot.lane.b32.xlu0 %v588, 4
      %v640 = vpop.permute.xlu0 %639
      %641 = vrot.lane.b32.xlu0 %v600, 4
      %v642 = vpop.permute.xlu0 %641
      %643 = vrot.lane.b32.xlu0 %v612, 4
      %v644 = vpop.permute.xlu0 %643
      %vm645 = vcmask 1046528
      %v646 = vrot.slane %v356, 1
      %v647 = vrot.slane %v404, 1
      %v648 = vsel %vm645, %v646, %v647
      %v649 = vrot.slane %v357, 1
      %v650 = vrot.slane %v405, 1
      %v651 = vsel %vm645, %v649, %v650
      %v652 = vrot.slane %v358, 1
      %v653 = vrot.slane %v406, 1
      %v654 = vsel %vm645, %v652, %v653
      %v655 = vrot.slane %v359, 1
      %v656 = vrot.slane %v407, 1
      %v657 = vsel %vm645, %v655, %v656
      %v658 = vrot.slane %v360, 1
      %v659 = vrot.slane %v408, 1
      %v660 = vsel %vm645, %v658, %v659
      %v661 = vrot.slane %v361, 1
      %v662 = vrot.slane %v409, 1
      %v663 = vsel %vm645, %v661, %v662
      %v664 = vrot.slane %v362, 1
      %v665 = vrot.slane %v410, 1
      %v666 = vsel %vm645, %v664, %v665
      %v667 = vrot.slane %v363, 1
      %v668 = vrot.slane %v411, 1
      %v669 = vsel %vm645, %v667, %v668
      %v670 = vrot.slane %v364, 1
      %v671 = vrot.slane %v412, 1
      %v672 = vsel %vm645, %v670, %v671
      %v673 = vrot.slane %v365, 1
      %v674 = vrot.slane %v413, 1
      %v675 = vsel %vm645, %v673, %v674
      %v676 = vrot.slane %v366, 1
      %v677 = vrot.slane %v414, 1
      %v678 = vsel %vm645, %v676, %v677
      %v679 = vrot.slane %v367, 1
      %v680 = vrot.slane %v415, 1
      %v681 = vsel %vm645, %v679, %v680
      %v682 = vrot.slane %v368, 1
      %v683 = vrot.slane %v416, 1
      %v684 = vsel %vm645, %v682, %v683
      %v685 = vrot.slane %v369, 1
      %v686 = vrot.slane %v417, 1
      %v687 = vsel %vm645, %v685, %v686
      %v688 = vrot.slane %v370, 1
      %v689 = vrot.slane %v418, 1
      %v690 = vsel %vm645, %v688, %v689
      %v691 = vrot.slane %v371, 1
      %v692 = vrot.slane %v419, 1
      %v693 = vsel %vm645, %v691, %v692
      %694 = vrot.lane.b32.xlu0 %v648, 8
      %v695 = vpop.permute.xlu0 %694
      %696 = vrot.lane.b32.xlu0 %v651, 8
      %v697 = vpop.permute.xlu0 %696
      %698 = vrot.lane.b32.xlu0 %v654, 8
      %v699 = vpop.permute.xlu0 %698
      %700 = vrot.lane.b32.xlu0 %v657, 8
      %v701 = vpop.permute.xlu0 %700
      %702 = vrot.lane.b32.xlu0 %v660, 8
      %v703 = vpop.permute.xlu0 %702
      %704 = vrot.lane.b32.xlu0 %v663, 8
      %v705 = vpop.permute.xlu0 %704
      %706 = vrot.lane.b32.xlu0 %v666, 8
      %v707 = vpop.permute.xlu0 %706
      %708 = vrot.lane.b32.xlu0 %v669, 8
      %v709 = vpop.permute.xlu0 %708
      %710 = vrot.lane.b32.xlu0 %v672, 8
      %v711 = vpop.permute.xlu0 %710
      %712 = vrot.lane.b32.xlu0 %v675, 8
      %v713 = vpop.permute.xlu0 %712
      %714 = vrot.lane.b32.xlu0 %v678, 8
      %v715 = vpop.permute.xlu0 %714
      %716 = vrot.lane.b32.xlu0 %v681, 8
      %v717 = vpop.permute.xlu0 %716
      %718 = vrot.lane.b32.xlu0 %v684, 8
      %v719 = vpop.permute.xlu0 %718
      %720 = vrot.lane.b32.xlu0 %v687, 8
      %v721 = vpop.permute.xlu0 %720
      %722 = vrot.lane.b32.xlu0 %v690, 8
      %v723 = vpop.permute.xlu0 %722
      %724 = vrot.lane.b32.xlu0 %v693, 8
      %v725 = vpop.permute.xlu0 %724
      %vm726 = vcmask 31744
      %v728 = vsel %vm726, %v356, %v614
      %v730 = vsel %vm726, %v357, %v616
      %v732 = vsel %vm726, %v358, %v618
      %v734 = vsel %vm726, %v359, %v620
      %v736 = vsel %vm726, %v360, %v622
      %v738 = vsel %vm726, %v361, %v624
      %v740 = vsel %vm726, %v362, %v626
      %v742 = vsel %vm726, %v363, %v628
      %v744 = vsel %vm726, %v364, %v630
      %v746 = vsel %vm726, %v365, %v632
      %v748 = vsel %vm726, %v366, %v634
      %v750 = vsel %vm726, %v367, %v636
      %v752 = vsel %vm726, %v368, %v638
      %v754 = vsel %vm726, %v369, %v640
      %v756 = vsel %vm726, %v370, %v642
      %v758 = vsel %vm726, %v371, %v644
      %vm759 = vcmask 64512
      %v761 = vsel %vm759, %v728, %v695
      %v763 = vsel %vm759, %v730, %v697
      %v765 = vsel %vm759, %v732, %v699
      %v767 = vsel %vm759, %v734, %v701
      %v769 = vsel %vm759, %v736, %v703
      %v771 = vsel %vm759, %v738, %v705
      %v773 = vsel %vm759, %v740, %v707
      %v775 = vsel %vm759, %v742, %v709
      %v777 = vsel %vm759, %v744, %v711
      %v779 = vsel %vm759, %v746, %v713
      %v781 = vsel %vm759, %v748, %v715
      %v783 = vsel %vm759, %v750, %v717
      %v785 = vsel %vm759, %v752, %v719
      %v787 = vsel %vm759, %v754, %v721
      %v789 = vsel %vm759, %v756, %v723
      %v791 = vsel %vm759, %v758, %v725
      %v792 = vld [vmem:[%s1] sm:$0xf]
      %v793 = vld [vmem:[%s1 + $0x4] sm:$0x3]
      %v796 = vunpack.c.l.b16 %v286
      %v797 = vunpack.c.l.b16 %v287
      %v798 = vpack.c.b16 %v797, %v796
      %v800 = vunpack.c.l.b16 %v288
      %v801 = vpack.c.b16 %v800, %v800
      %v803 = vshrl.u32 %v798, 16
      %v805 = vshll.u32 %v798, 16
      %v807 = vrot.slane %v805, 1
      %v808 = vor.u32 %v803, %v807
      %v810 = vshll.u32 %v801, 16
      %v812 = vrot.slane %v810, 1
      %v813 = vsel %vm420, %v808, %v812
      %814 = vrot.lane.b32.xlu0 %v813, 4
      %v815 = vpop.permute.xlu0 %814
      %v816 = vrot.slane %v798, 1
      %v817 = vrot.slane %v801, 1
      %v818 = vsel %vm645, %v816, %v817
      %819 = vrot.lane.b32.xlu0 %v818, 8
      %v820 = vpop.permute.xlu0 %819
      %v822 = vsel %vm726, %v798, %v815
      %v824 = vsel %vm759, %v822, %v820
      %s825 = scalar_lea.vmem %s1, 8
      %v826 = vld [vmem:[%s825] sm:$0xf]
      %v827 = vld [vmem:[%s825 + $0x4] sm:$0x3]
      %v830 = vunpack.c.l.b16 %v826
      %v831 = vunpack.c.l.b16 %v827
      %v832 = vpack.c.b16 %v831, %v830
      %vm833 = vcmask 97280
      %v834 = vsel %vm833, %v763, 0
      %v836 = vsel %vm833, %v765, 0
      %v838 = vsel %vm833, %v767, 0
      %v840 = vsel %vm833, %v769, 0
      %v842 = vsel %vm833, %v771, 0
      %v844 = vsel %vm833, %v773, 0
      %v846 = vsel %vm833, %v775, 0
      %v848 = vsel %vm833, %v777, 0
      %v850 = vsel %vm833, %v779, 0
      %v852 = vsel %vm833, %v781, 0
      %v854 = vsel %vm833, %v783, 0
      %v856 = vsel %vm833, %v785, 0
      %v858 = vsel %vm833, %v787, 0
      %v860 = vsel %vm833, %v789, 0
      %v862 = vsel %vm833, %v791, 0
      %v864 = vsel %vm833, %v824, 0
      %vm866 = vcmask 1045504
      %v868 = vsel %vm866, %v832, 0
      %870 = vmatprep.subr.bf16.mxu0 0
      %871 = vmatpush1.bf16.msra.mxu0 %v868
      %872 = vmatprep.subr.bf16.mxu0 0
      %873 = vmatpush1.bf16.msra.mxu0 0
      %874 = vmatprep.subr.bf16.mxu0 0
      %875 = vmatpush1.bf16.msra.mxu0 0
      %876 = vmatprep.subr.bf16.mxu0 0
      %877 = vmatpush1.bf16.msra.mxu0 0
      %878 = vmatprep.subr.bf16.mxu0 0
      %879 = vmatpush1.bf16.msra.mxu0 0
      %880 = vmatprep.subr.bf16.mxu0 0
      %881 = vmatpush1.bf16.msra.mxu0 0
      %882 = vmatprep.subr.bf16.mxu0 0
      %883 = vmatpush1.bf16.msra.mxu0 0
      %884 = vmatprep.subr.bf16.mxu0 0
      %885 = vmatpush1.bf16.msra.mxu0 0
      %886 = vmatprep.subr.bf16.mxu0 0
      %887 = vmatpush1.bf16.msra.mxu0 0
      %888 = vmatprep.subr.bf16.mxu0 0
      %889 = vmatpush1.bf16.msra.mxu0 0
      %890 = vmatprep.subr.bf16.mxu0 0
      %891 = vmatpush1.bf16.msra.mxu0 0
      %892 = vmatprep.subr.bf16.mxu0 0
      %893 = vmatpush1.bf16.msra.mxu0 0
      %894 = vmatprep.subr.bf16.mxu0 0
      %895 = vmatpush1.bf16.msra.mxu0 0
      %896 = vmatprep.subr.bf16.mxu0 0
      %897 = vmatpush1.bf16.msra.mxu0 0
      %898 = vmatprep.subr.bf16.mxu0 0
      %899 = vmatpush1.bf16.msra.mxu0 0
      %900 = vmatprep.subr.bf16.mxu0 0
      %901 = vmatpush1.bf16.msra.mxu0 0
      %902 = vmatprep.mubr.bf16.mxu0 0
      %903 = vmatmul.mubr.bf16.gmra.mrb[0].mxu0 %v834
      %v904 = vpop.f32.mrb[0].mxu0
      %v905 = vadd.f32 0.0, %v904
      %v906 = vpop.f32.mrb[0].mxu0
      %v907 = vpop.f32.mrb[0].mxu0
      %v908 = vadd.f32 0.0, %v907
      %v909 = vpop.f32.mrb[0].mxu0
      %910 = vmatprep.mubr.bf16.mxu0 0
      %911 = vmatmul.mubr.bf16.gmra.mrb[0].mxu0 %v836
      %v912 = vpop.f32.mrb[0].mxu0
      %v913 = vadd.f32 0.0, %v912
      %v914 = vpop.f32.mrb[0].mxu0
      %v915 = vpop.f32.mrb[0].mxu0
      %v916 = vadd.f32 0.0, %v915
      %v917 = vpop.f32.mrb[0].mxu0
      %918 = vmatprep.mubr.bf16.mxu0 0
      %919 = vmatmul.mubr.bf16.gmra.mrb[0].mxu0 %v838
      %v920 = vpop.f32.mrb[0].mxu0
      %v921 = vadd.f32 0.0, %v920
      %v922 = vpop.f32.mrb[0].mxu0
      %v923 = vpop.f32.mrb[0].mxu0
      %v924 = vadd.f32 0.0, %v923
      %v925 = vpop.f32.mrb[0].mxu0
      %926 = vmatprep.mubr.bf16.mxu0 0
      %927 = vmatmul.mubr.bf16.gmra.mrb[0].mxu0 %v840
      %v928 = vpop.f32.mrb[0].mxu0
      %v929 = vadd.f32 0.0, %v928
      %v930 = vpop.f32.mrb[0].mxu0
      %v931 = vpop.f32.mrb[0].mxu0
      %v932 = vadd.f32 0.0, %v931
      %v933 = vpop.f32.mrb[0].mxu0
      %934 = vmatprep.mubr.bf16.mxu0 0
      %935 = vmatmul.mubr.bf16.gmra.mrb[0].mxu0 %v842
      %v936 = vpop.f32.mrb[0].mxu0
      %v937 = vadd.f32 0.0, %v936
      %v938 = vpop.f32.mrb[0].mxu0
      %v939 = vpop.f32.mrb[0].mxu0
      %v940 = vadd.f32 0.0, %v939
      %v941 = vpop.f32.mrb[0].mxu0
      %942 = vmatprep.mubr.bf16.mxu0 0
      %943 = vmatmul.mubr.bf16.gmra.mrb[0].mxu0 %v844
      %v944 = vpop.f32.mrb[0].mxu0
      %v945 = vadd.f32 0.0, %v944
      %v946 = vpop.f32.mrb[0].mxu0
      %v947 = vpop.f32.mrb[0].mxu0
      %v948 = vadd.f32 0.0, %v947
      %v949 = vpop.f32.mrb[0].mxu0
      %950 = vmatprep.mubr.bf16.mxu0 0
      %951 = vmatmul.mubr.bf16.gmra.mrb[0].mxu0 %v846
      %v952 = vpop.f32.mrb[0].mxu0
      %v953 = vadd.f32 0.0, %v952
      %v954 = vpop.f32.mrb[0].mxu0
      %v955 = vpop.f32.mrb[0].mxu0
      %v956 = vadd.f32 0.0, %v955
      %v957 = vpop.f32.mrb[0].mxu0
      %958 = vmatprep.mubr.bf16.mxu0 0
      %959 = vmatmul.mubr.bf16.gmra.mrb[0].mxu0 %v848
      %v960 = vpop.f32.mrb[0].mxu0
      %v961 = vadd.f32 0.0, %v960
      %v962 = vpop.f32.mrb[0].mxu0
      %v963 = vpop.f32.mrb[0].mxu0
      %v964 = vadd.f32 0.0, %v963
      %v965 = vpop.f32.mrb[0].mxu0
      %966 = vmatprep.mubr.bf16.mxu0 0
      %967 = vmatmul.mubr.bf16.gmra.mrb[0].mxu0 %v850
      %v968 = vpop.f32.mrb[0].mxu0
      %v969 = vadd.f32 0.0, %v968
      %v970 = vpop.f32.mrb[0].mxu0
      %v971 = vpop.f32.mrb[0].mxu0
      %v972 = vadd.f32 0.0, %v971
      %v973 = vpop.f32.mrb[0].mxu0
      %974 = vmatprep.mubr.bf16.mxu0 0
      %975 = vmatmul.mubr.bf16.gmra.mrb[0].mxu0 %v852
      %v976 = vpop.f32.mrb[0].mxu0
      %v977 = vadd.f32 0.0, %v976
      %v978 = vpop.f32.mrb[0].mxu0
      %v979 = vpop.f32.mrb[0].mxu0
      %v980 = vadd.f32 0.0, %v979
      %v981 = vpop.f32.mrb[0].mxu0
      %982 = vmatprep.mubr.bf16.mxu0 0
      %983 = vmatmul.mubr.bf16.gmra.mrb[0].mxu0 %v854
      %v984 = vpop.f32.mrb[0].mxu0
      %v985 = vadd.f32 0.0, %v984
      %v986 = vpop.f32.mrb[0].mxu0
      %v987 = vpop.f32.mrb[0].mxu0
      %v988 = vadd.f32 0.0, %v987
      %v989 = vpop.f32.mrb[0].mxu0
      %990 = vmatprep.mubr.bf16.mxu0 0
      %991 = vmatmul.mubr.bf16.gmra.mrb[0].mxu0 %v856
      %v992 = vpop.f32.mrb[0].mxu0
      %v993 = vadd.f32 0.0, %v992
      %v994 = vpop.f32.mrb[0].mxu0
      %v995 = vpop.f32.mrb[0].mxu0
      %v996 = vadd.f32 0.0, %v995
      %v997 = vpop.f32.mrb[0].mxu0
      %998 = vmatprep.mubr.bf16.mxu0 0
      %999 = vmatmul.mubr.bf16.gmra.mrb[0].mxu0 %v858
      %v1000 = vpop.f32.mrb[0].mxu0
      %v1001 = vadd.f32 0.0, %v1000
      %v1002 = vpop.f32.mrb[0].mxu0
      %v1003 = vpop.f32.mrb[0].mxu0
      %v1004 = vadd.f32 0.0, %v1003
      %v1005 = vpop.f32.mrb[0].mxu0
      %1006 = vmatprep.mubr.bf16.mxu0 0
      %1007 = vmatmul.mubr.bf16.gmra.mrb[0].mxu0 %v860
      %v1008 = vpop.f32.mrb[0].mxu0
      %v1009 = vadd.f32 0.0, %v1008
      %v1010 = vpop.f32.mrb[0].mxu0
      %v1011 = vpop.f32.mrb[0].mxu0
      %v1012 = vadd.f32 0.0, %v1011
      %v1013 = vpop.f32.mrb[0].mxu0
      %1014 = vmatprep.mubr.bf16.mxu0 0
      %1015 = vmatmul.mubr.bf16.gmra.mrb[0].mxu0 %v862
      %v1016 = vpop.f32.mrb[0].mxu0
      %v1017 = vadd.f32 0.0, %v1016
      %v1018 = vpop.f32.mrb[0].mxu0
      %v1019 = vpop.f32.mrb[0].mxu0
      %v1020 = vadd.f32 0.0, %v1019
      %v1021 = vpop.f32.mrb[0].mxu0
      %1022 = vmatprep.mubr.bf16.mxu0 0
      %1023 = vmatmul.mubr.bf16.gmra.mrb[0].mxu0 %v864
      %v1024 = vpop.f32.mrb[0].mxu0
      %v1025 = vadd.f32 0.0, %v1024
      %v1026 = vpop.f32.mrb[0].mxu0
      %v1027 = vpop.f32.mrb[0].mxu0
      %v1028 = vadd.f32 0.0, %v1027
      %v1029 = vpop.f32.mrb[0].mxu0
      %1030 = vdwg.mxu0
      %v1033 = vunpack.c.l.b16 %v792
      %v1034 = vunpack.c.l.b16 %v793
      %v1035 = vpack.c.b16 %v1034, %v1033
      %v1036 = vsel %vm833, %v761, 0
      %v1039 = vsel %vm866, %v1035, 0
      %1041 = vmatprep.subr.bf16.mxu0 0
      %1042 = vmatpush1.bf16.msra.mxu0 %v1039
      %1043 = vmatprep.subr.bf16.mxu0 0
      %1044 = vmatpush1.bf16.msra.mxu0 0
      %1045 = vmatprep.subr.bf16.mxu0 0
      %1046 = vmatpush1.bf16.msra.mxu0 0
      %1047 = vmatprep.subr.bf16.mxu0 0
      %1048 = vmatpush1.bf16.msra.mxu0 0
      %1049 = vmatprep.subr.bf16.mxu0 0
      %1050 = vmatpush1.bf16.msra.mxu0 0
      %1051 = vmatprep.subr.bf16.mxu0 0
      %1052 = vmatpush1.bf16.msra.mxu0 0
      %1053 = vmatprep.subr.bf16.mxu0 0
      %1054 = vmatpush1.bf16.msra.mxu0 0
      %1055 = vmatprep.subr.bf16.mxu0 0
      %1056 = vmatpush1.bf16.msra.mxu0 0
      %1057 = vmatprep.subr.bf16.mxu0 0
      %1058 = vmatpush1.bf16.msra.mxu0 0
      %1059 = vmatprep.subr.bf16.mxu0 0
      %1060 = vmatpush1.bf16.msra.mxu0 0
      %1061 = vmatprep.subr.bf16.mxu0 0
      %1062 = vmatpush1.bf16.msra.mxu0 0
      %1063 = vmatprep.subr.bf16.mxu0 0
      %1064 = vmatpush1.bf16.msra.mxu0 0
      %1065 = vmatprep.subr.bf16.mxu0 0
      %1066 = vmatpush1.bf16.msra.mxu0 0
      %1067 = vmatprep.subr.bf16.mxu0 0
      %1068 = vmatpush1.bf16.msra.mxu0 0
      %1069 = vmatprep.subr.bf16.mxu0 0
      %1070 = vmatpush1.bf16.msra.mxu0 0
      %1071 = vmatprep.subr.bf16.mxu0 0
      %1072 = vmatpush1.bf16.msra.mxu0 0
      %1073 = vmatprep.mubr.bf16.mxu0 0
      %1074 = vmatmul.mubr.bf16.gmra.mrb[0].mxu0 %v1036
      %v1075 = vpop.f32.mrb[0].mxu0
      %v1076 = vadd.f32 %v905, %v1075
      %v1077 = vpop.f32.mrb[0].mxu0
      %v1078 = vpop.f32.mrb[0].mxu0
      %v1079 = vadd.f32 %v908, %v1078
      %v1080 = vpop.f32.mrb[0].mxu0
      %1081 = vmatprep.mubr.bf16.mxu0 0
      %1082 = vmatmul.mubr.bf16.gmra.mrb[0].mxu0 %v834
      %v1083 = vpop.f32.mrb[0].mxu0
      %v1084 = vadd.f32 %v913, %v1083
      %v1085 = vpop.f32.mrb[0].mxu0
      %v1086 = vpop.f32.mrb[0].mxu0
      %v1087 = vadd.f32 %v916, %v1086
      %v1088 = vpop.f32.mrb[0].mxu0
      %1089 = vmatprep.mubr.bf16.mxu0 0
      %1090 = vmatmul.mubr.bf16.gmra.mrb[0].mxu0 %v836
      %v1091 = vpop.f32.mrb[0].mxu0
      %v1092 = vadd.f32 %v921, %v1091
      %v1093 = vpop.f32.mrb[0].mxu0
      %v1094 = vpop.f32.mrb[0].mxu0
      %v1095 = vadd.f32 %v924, %v1094
      %v1096 = vpop.f32.mrb[0].mxu0
      %1097 = vmatprep.mubr.bf16.mxu0 0
      %1098 = vmatmul.mubr.bf16.gmra.mrb[0].mxu0 %v838
      %v1099 = vpop.f32.mrb[0].mxu0
      %v1100 = vadd.f32 %v929, %v1099
      %v1101 = vpop.f32.mrb[0].mxu0
      %v1102 = vpop.f32.mrb[0].mxu0
      %v1103 = vadd.f32 %v932, %v1102
      %v1104 = vpop.f32.mrb[0].mxu0
      %1105 = vmatprep.mubr.bf16.mxu0 0
      %1106 = vmatmul.mubr.bf16.gmra.mrb[0].mxu0 %v840
      %v1107 = vpop.f32.mrb[0].mxu0
      %v1108 = vadd.f32 %v937, %v1107
      %v1109 = vpop.f32.mrb[0].mxu0
      %v1110 = vpop.f32.mrb[0].mxu0
      %v1111 = vadd.f32 %v940, %v1110
      %v1112 = vpop.f32.mrb[0].mxu0
      %1113 = vmatprep.mubr.bf16.mxu0 0
      %1114 = vmatmul.mubr.bf16.gmra.mrb[0].mxu0 %v842
      %v1115 = vpop.f32.mrb[0].mxu0
      %v1116 = vadd.f32 %v945, %v1115
      %v1117 = vpop.f32.mrb[0].mxu0
      %v1118 = vpop.f32.mrb[0].mxu0
      %v1119 = vadd.f32 %v948, %v1118
      %v1120 = vpop.f32.mrb[0].mxu0
      %1121 = vmatprep.mubr.bf16.mxu0 0
      %1122 = vmatmul.mubr.bf16.gmra.mrb[0].mxu0 %v844
      %v1123 = vpop.f32.mrb[0].mxu0
      %v1124 = vadd.f32 %v953, %v1123
      %v1125 = vpop.f32.mrb[0].mxu0
      %v1126 = vpop.f32.mrb[0].mxu0
      %v1127 = vadd.f32 %v956, %v1126
      %v1128 = vpop.f32.mrb[0].mxu0
      %1129 = vmatprep.mubr.bf16.mxu0 0
      %1130 = vmatmul.mubr.bf16.gmra.mrb[0].mxu0 %v846
      %v1131 = vpop.f32.mrb[0].mxu0
      %v1132 = vadd.f32 %v961, %v1131
      %v1133 = vpop.f32.mrb[0].mxu0
      %v1134 = vpop.f32.mrb[0].mxu0
      %v1135 = vadd.f32 %v964, %v1134
      %v1136 = vpop.f32.mrb[0].mxu0
      %1137 = vmatprep.mubr.bf16.mxu0 0
      %1138 = vmatmul.mubr.bf16.gmra.mrb[0].mxu0 %v848
      %v1139 = vpop.f32.mrb[0].mxu0
      %v1140 = vadd.f32 %v969, %v1139
      %v1141 = vpop.f32.mrb[0].mxu0
      %v1142 = vpop.f32.mrb[0].mxu0
      %v1143 = vadd.f32 %v972, %v1142
      %v1144 = vpop.f32.mrb[0].mxu0
      %1145 = vmatprep.mubr.bf16.mxu0 0
      %1146 = vmatmul.mubr.bf16.gmra.mrb[0].mxu0 %v850
      %v1147 = vpop.f32.mrb[0].mxu0
      %v1148 = vadd.f32 %v977, %v1147
      %v1149 = vpop.f32.mrb[0].mxu0
      %v1150 = vpop.f32.mrb[0].mxu0
      %v1151 = vadd.f32 %v980, %v1150
      %v1152 = vpop.f32.mrb[0].mxu0
      %1153 = vmatprep.mubr.bf16.mxu0 0
      %1154 = vmatmul.mubr.bf16.gmra.mrb[0].mxu0 %v852
      %v1155 = vpop.f32.mrb[0].mxu0
      %v1156 = vadd.f32 %v985, %v1155
      %v1157 = vpop.f32.mrb[0].mxu0
      %v1158 = vpop.f32.mrb[0].mxu0
      %v1159 = vadd.f32 %v988, %v1158
      %v1160 = vpop.f32.mrb[0].mxu0
      %1161 = vmatprep.mubr.bf16.mxu0 0
      %1162 = vmatmul.mubr.bf16.gmra.mrb[0].mxu0 %v854
      %v1163 = vpop.f32.mrb[0].mxu0
      %v1164 = vadd.f32 %v993, %v1163
      %v1165 = vpop.f32.mrb[0].mxu0
      %v1166 = vpop.f32.mrb[0].mxu0
      %v1167 = vadd.f32 %v996, %v1166
      %v1168 = vpop.f32.mrb[0].mxu0
      %1169 = vmatprep.mubr.bf16.mxu0 0
      %1170 = vmatmul.mubr.bf16.gmra.mrb[0].mxu0 %v856
      %v1171 = vpop.f32.mrb[0].mxu0
      %v1172 = vadd.f32 %v1001, %v1171
      %v1173 = vpop.f32.mrb[0].mxu0
      %v1174 = vpop.f32.mrb[0].mxu0
      %v1175 = vadd.f32 %v1004, %v1174
      %v1176 = vpop.f32.mrb[0].mxu0
      %1177 = vmatprep.mubr.bf16.mxu0 0
      %1178 = vmatmul.mubr.bf16.gmra.mrb[0].mxu0 %v858
      %v1179 = vpop.f32.mrb[0].mxu0
      %v1180 = vadd.f32 %v1009, %v1179
      %v1181 = vpop.f32.mrb[0].mxu0
      %v1182 = vpop.f32.mrb[0].mxu0
      %v1183 = vadd.f32 %v1012, %v1182
      %v1184 = vpop.f32.mrb[0].mxu0
      %1185 = vmatprep.mubr.bf16.mxu0 0
      %1186 = vmatmul.mubr.bf16.gmra.mrb[0].mxu0 %v860
      %v1187 = vpop.f32.mrb[0].mxu0
      %v1188 = vadd.f32 %v1017, %v1187
      %v1189 = vpop.f32.mrb[0].mxu0
      %v1190 = vpop.f32.mrb[0].mxu0
      %v1191 = vadd.f32 %v1020, %v1190
      %v1192 = vpop.f32.mrb[0].mxu0
      %1193 = vmatprep.mubr.bf16.mxu0 0
      %1194 = vmatmul.mubr.bf16.gmra.mrb[0].mxu0 %v862
      %v1195 = vpop.f32.mrb[0].mxu0
      %v1196 = vadd.f32 %v1025, %v1195
      %v1197 = vpop.f32.mrb[0].mxu0
      %v1198 = vpop.f32.mrb[0].mxu0
      %v1199 = vadd.f32 %v1028, %v1198
      %v1200 = vpop.f32.mrb[0].mxu0
      %1201 = vdwg.mxu0
      %v1204 = vunpack.c.l.b16 %v289
      %v1205 = vunpack.c.l.b16 %v290
      %v1206 = vpack.c.b16 %v1205, %v1204
      %v1208 = vunpack.c.l.b16 %v291
      %v1209 = vpack.c.b16 %v1208, %v1208
      %v1211 = vshrl.u32 %v1206, 16
      %v1213 = vshll.u32 %v1206, 16
      %v1215 = vrot.slane %v1213, 1
      %v1216 = vor.u32 %v1211, %v1215
      %v1218 = vshll.u32 %v1209, 16
      %v1220 = vrot.slane %v1218, 1
      %v1221 = vsel %vm420, %v1216, %v1220
      %1222 = vrot.lane.b32.xlu0 %v1221, 4
      %v1223 = vpop.permute.xlu0 %1222
      %v1224 = vrot.slane %v1206, 1
      %v1225 = vrot.slane %v1209, 1
      %v1226 = vsel %vm645, %v1224, %v1225
      %1227 = vrot.lane.b32.xlu0 %v1226, 8
      %v1228 = vpop.permute.xlu0 %1227
      %v1230 = vsel %vm726, %v1206, %v1223
      %v1232 = vsel %vm759, %v1230, %v1228
      %s1233 = scalar_lea.vmem %s1, 16
      %v1234 = vld [vmem:[%s1233] sm:$0xf]
      %v1235 = vld [vmem:[%s1233 + $0x4] sm:$0x3]
      %v1238 = vunpack.c.l.b16 %v1234
      %v1239 = vunpack.c.l.b16 %v1235
      %v1240 = vpack.c.b16 %v1239, %v1238
      %v1241 = vsel %vm833, %v1232, 0
      %v1244 = vsel %vm866, %v1240, 0
      %1246 = vmatprep.subr.bf16.mxu0 0
      %1247 = vmatpush1.bf16.msra.mxu0 %v1244
      %1248 = vmatprep.subr.bf16.mxu0 0
      %1249 = vmatpush1.bf16.msra.mxu0 0
      %1250 = vmatprep.subr.bf16.mxu0 0
      %1251 = vmatpush1.bf16.msra.mxu0 0
      %1252 = vmatprep.subr.bf16.mxu0 0
      %1253 = vmatpush1.bf16.msra.mxu0 0
      %1254 = vmatprep.subr.bf16.mxu0 0
      %1255 = vmatpush1.bf16.msra.mxu0 0
      %1256 = vmatprep.subr.bf16.mxu0 0
      %1257 = vmatpush1.bf16.msra.mxu0 0
      %1258 = vmatprep.subr.bf16.mxu0 0
      %1259 = vmatpush1.bf16.msra.mxu0 0
      %1260 = vmatprep.subr.bf16.mxu0 0
      %1261 = vmatpush1.bf16.msra.mxu0 0
      %1262 = vmatprep.subr.bf16.mxu0 0
      %1263 = vmatpush1.bf16.msra.mxu0 0
      %1264 = vmatprep.subr.bf16.mxu0 0
      %1265 = vmatpush1.bf16.msra.mxu0 0
      %1266 = vmatprep.subr.bf16.mxu0 0
      %1267 = vmatpush1.bf16.msra.mxu0 0
      %1268 = vmatprep.subr.bf16.mxu0 0
      %1269 = vmatpush1.bf16.msra.mxu0 0
      %1270 = vmatprep.subr.bf16.mxu0 0
      %1271 = vmatpush1.bf16.msra.mxu0 0
      %1272 = vmatprep.subr.bf16.mxu0 0
      %1273 = vmatpush1.bf16.msra.mxu0 0
      %1274 = vmatprep.subr.bf16.mxu0 0
      %1275 = vmatpush1.bf16.msra.mxu0 0
      %1276 = vmatprep.subr.bf16.mxu0 0
      %1277 = vmatpush1.bf16.msra.mxu0 0
      %1278 = vmatprep.mubr.bf16.mxu0 0
      %1279 = vmatmul.mubr.bf16.gmra.mrb[0].mxu0 %v836
      %v1280 = vpop.f32.mrb[0].mxu0
      %v1281 = vadd.f32 0.0, %v1280
      %v1282 = vpop.f32.mrb[0].mxu0
      %v1283 = vpop.f32.mrb[0].mxu0
      %v1284 = vadd.f32 0.0, %v1283
      %v1285 = vpop.f32.mrb[0].mxu0
      %1286 = vmatprep.mubr.bf16.mxu0 0
      %1287 = vmatmul.mubr.bf16.gmra.mrb[0].mxu0 %v838
      %v1288 = vpop.f32.mrb[0].mxu0
      %v1289 = vadd.f32 0.0, %v1288
      %v1290 = vpop.f32.mrb[0].mxu0
      %v1291 = vpop.f32.mrb[0].mxu0
      %v1292 = vadd.f32 0.0, %v1291
      %v1293 = vpop.f32.mrb[0].mxu0
      %1294 = vmatprep.mubr.bf16.mxu0 0
      %1295 = vmatmul.mubr.bf16.gmra.mrb[0].mxu0 %v840
      %v1296 = vpop.f32.mrb[0].mxu0
      %v1297 = vadd.f32 0.0, %v1296
      %v1298 = vpop.f32.mrb[0].mxu0
      %v1299 = vpop.f32.mrb[0].mxu0
      %v1300 = vadd.f32 0.0, %v1299
      %v1301 = vpop.f32.mrb[0].mxu0
      %1302 = vmatprep.mubr.bf16.mxu0 0
      %1303 = vmatmul.mubr.bf16.gmra.mrb[0].mxu0 %v842
      %v1304 = vpop.f32.mrb[0].mxu0
      %v1305 = vadd.f32 0.0, %v1304
      %v1306 = vpop.f32.mrb[0].mxu0
      %v1307 = vpop.f32.mrb[0].mxu0
      %v1308 = vadd.f32 0.0, %v1307
      %v1309 = vpop.f32.mrb[0].mxu0
      %1310 = vmatprep.mubr.bf16.mxu0 0
      %1311 = vmatmul.mubr.bf16.gmra.mrb[0].mxu0 %v844
      %v1312 = vpop.f32.mrb[0].mxu0
      %v1313 = vadd.f32 0.0, %v1312
      %v1314 = vpop.f32.mrb[0].mxu0
      %v1315 = vpop.f32.mrb[0].mxu0
      %v1316 = vadd.f32 0.0, %v1315
      %v1317 = vpop.f32.mrb[0].mxu0
      %1318 = vmatprep.mubr.bf16.mxu0 0
      %1319 = vmatmul.mubr.bf16.gmra.mrb[0].mxu0 %v846
      %v1320 = vpop.f32.mrb[0].mxu0
      %v1321 = vadd.f32 0.0, %v1320
      %v1322 = vpop.f32.mrb[0].mxu0
      %v1323 = vpop.f32.mrb[0].mxu0
      %v1324 = vadd.f32 0.0, %v1323
      %v1325 = vpop.f32.mrb[0].mxu0
      %1326 = vmatprep.mubr.bf16.mxu0 0
      %1327 = vmatmul.mubr.bf16.gmra.mrb[0].mxu0 %v848
      %v1328 = vpop.f32.mrb[0].mxu0
      %v1329 = vadd.f32 0.0, %v1328
      %v1330 = vpop.f32.mrb[0].mxu0
      %v1331 = vpop.f32.mrb[0].mxu0
      %v1332 = vadd.f32 0.0, %v1331
      %v1333 = vpop.f32.mrb[0].mxu0
      %1334 = vmatprep.mubr.bf16.mxu0 0
      %1335 = vmatmul.mubr.bf16.gmra.mrb[0].mxu0 %v850
      %v1336 = vpop.f32.mrb[0].mxu0
      %v1337 = vadd.f32 0.0, %v1336
      %v1338 = vpop.f32.mrb[0].mxu0
      %v1339 = vpop.f32.mrb[0].mxu0
      %v1340 = vadd.f32 0.0, %v1339
      %v1341 = vpop.f32.mrb[0].mxu0
      %1342 = vmatprep.mubr.bf16.mxu0 0
      %1343 = vmatmul.mubr.bf16.gmra.mrb[0].mxu0 %v852
      %v1344 = vpop.f32.mrb[0].mxu0
      %v1345 = vadd.f32 0.0, %v1344
      %v1346 = vpop.f32.mrb[0].mxu0
      %v1347 = vpop.f32.mrb[0].mxu0
      %v1348 = vadd.f32 0.0, %v1347
      %v1349 = vpop.f32.mrb[0].mxu0
      %1350 = vmatprep.mubr.bf16.mxu0 0
      %1351 = vmatmul.mubr.bf16.gmra.mrb[0].mxu0 %v854
      %v1352 = vpop.f32.mrb[0].mxu0
      %v1353 = vadd.f32 0.0, %v1352
      %v1354 = vpop.f32.mrb[0].mxu0
      %v1355 = vpop.f32.mrb[0].mxu0
      %v1356 = vadd.f32 0.0, %v1355
      %v1357 = vpop.f32.mrb[0].mxu0
      %1358 = vmatprep.mubr.bf16.mxu0 0
      %1359 = vmatmul.mubr.bf16.gmra.mrb[0].mxu0 %v856
      %v1360 = vpop.f32.mrb[0].mxu0
      %v1361 = vadd.f32 0.0, %v1360
      %v1362 = vpop.f32.mrb[0].mxu0
      %v1363 = vpop.f32.mrb[0].mxu0
      %v1364 = vadd.f32 0.0, %v1363
      %v1365 = vpop.f32.mrb[0].mxu0
      %1366 = vmatprep.mubr.bf16.mxu0 0
      %1367 = vmatmul.mubr.bf16.gmra.mrb[0].mxu0 %v858
      %v1368 = vpop.f32.mrb[0].mxu0
      %v1369 = vadd.f32 0.0, %v1368
      %v1370 = vpop.f32.mrb[0].mxu0
      %v1371 = vpop.f32.mrb[0].mxu0
      %v1372 = vadd.f32 0.0, %v1371
      %v1373 = vpop.f32.mrb[0].mxu0
      %1374 = vmatprep.mubr.bf16.mxu0 0
      %1375 = vmatmul.mubr.bf16.gmra.mrb[0].mxu0 %v860
      %v1376 = vpop.f32.mrb[0].mxu0
      %v1377 = vadd.f32 0.0, %v1376
      %v1378 = vpop.f32.mrb[0].mxu0
      %v1379 = vpop.f32.mrb[0].mxu0
      %v1380 = vadd.f32 0.0, %v1379
      %v1381 = vpop.f32.mrb[0].mxu0
      %1382 = vmatprep.mubr.bf16.mxu0 0
      %1383 = vmatmul.mubr.bf16.gmra.mrb[0].mxu0 %v862
      %v1384 = vpop.f32.mrb[0].mxu0
      %v1385 = vadd.f32 0.0, %v1384
      %v1386 = vpop.f32.mrb[0].mxu0
      %v1387 = vpop.f32.mrb[0].mxu0
      %v1388 = vadd.f32 0.0, %v1387
      %v1389 = vpop.f32.mrb[0].mxu0
      %1390 = vmatprep.mubr.bf16.mxu0 0
      %1391 = vmatmul.mubr.bf16.gmra.mrb[0].mxu0 %v864
      %v1392 = vpop.f32.mrb[0].mxu0
      %v1393 = vadd.f32 0.0, %v1392
      %v1394 = vpop.f32.mrb[0].mxu0
      %v1395 = vpop.f32.mrb[0].mxu0
      %v1396 = vadd.f32 0.0, %v1395
      %v1397 = vpop.f32.mrb[0].mxu0
      %1398 = vmatprep.mubr.bf16.mxu0 0
      %1399 = vmatmul.mubr.bf16.gmra.mrb[0].mxu0 %v1241
      %v1400 = vpop.f32.mrb[0].mxu0
      %v1401 = vadd.f32 0.0, %v1400
      %v1402 = vpop.f32.mrb[0].mxu0
      %v1403 = vpop.f32.mrb[0].mxu0
      %v1404 = vadd.f32 0.0, %v1403
      %v1405 = vpop.f32.mrb[0].mxu0
      %1406 = vdwg.mxu0
      %v1407 = vadd.f32 %v1076, %v1281
      %v1408 = vadd.f32 %v1079, %v1284
      %v1409 = vadd.f32 %v1084, %v1289
      %v1410 = vadd.f32 %v1087, %v1292
      %v1411 = vadd.f32 %v1092, %v1297
      %v1412 = vadd.f32 %v1095, %v1300
      %v1413 = vadd.f32 %v1100, %v1305
      %v1414 = vadd.f32 %v1103, %v1308
      %v1415 = vadd.f32 %v1108, %v1313
      %v1416 = vadd.f32 %v1111, %v1316
      %v1417 = vadd.f32 %v1116, %v1321
      %v1418 = vadd.f32 %v1119, %v1324
      %v1419 = vadd.f32 %v1124, %v1329
      %v1420 = vadd.f32 %v1127, %v1332
      %v1421 = vadd.f32 %v1132, %v1337
      %v1422 = vadd.f32 %v1135, %v1340
      %v1423 = vadd.f32 %v1140, %v1345
      %v1424 = vadd.f32 %v1143, %v1348
      %v1425 = vadd.f32 %v1148, %v1353
      %v1426 = vadd.f32 %v1151, %v1356
      %v1427 = vadd.f32 %v1156, %v1361
      %v1428 = vadd.f32 %v1159, %v1364
      %v1429 = vadd.f32 %v1164, %v1369
      %v1430 = vadd.f32 %v1167, %v1372
      %v1431 = vadd.f32 %v1172, %v1377
      %v1432 = vadd.f32 %v1175, %v1380
      %v1433 = vadd.f32 %v1180, %v1385
      %v1434 = vadd.f32 %v1183, %v1388
      %v1435 = vadd.f32 %v1188, %v1393
      %v1436 = vadd.f32 %v1191, %v1396
      %v1437 = vadd.f32 %v1196, %v1401
      %v1438 = vadd.f32 %v1199, %v1404
      %v1439 = vld [vmem:[%s2] sm:$0x1]
      %v1441 = vlaneseq
      %v1442 = vshrl.u32 %v1441, 7
      %v1443 = vsub.s32 0, %v1442
      %v1444 = vrot.slane %v1439, %v1443
      %v1446 = vmul.f32 %v1407, %v1444
      %v1447 = vmul.f32 %v1408, %v1444
      %v1448 = vmul.f32 %v1409, %v1444
      %v1449 = vmul.f32 %v1410, %v1444
      %v1450 = vmul.f32 %v1411, %v1444
      %v1451 = vmul.f32 %v1412, %v1444
      %v1452 = vmul.f32 %v1413, %v1444
      %v1453 = vmul.f32 %v1414, %v1444
      %v1454 = vmul.f32 %v1415, %v1444
      %v1455 = vmul.f32 %v1416, %v1444
      %v1456 = vmul.f32 %v1417, %v1444
      %v1457 = vmul.f32 %v1418, %v1444
      %v1458 = vmul.f32 %v1419, %v1444
      %v1459 = vmul.f32 %v1420, %v1444
      %v1460 = vmul.f32 %v1421, %v1444
      %v1461 = vmul.f32 %v1422, %v1444
      %v1462 = vmul.f32 %v1423, %v1444
      %v1463 = vmul.f32 %v1424, %v1444
      %v1464 = vmul.f32 %v1425, %v1444
      %v1465 = vmul.f32 %v1426, %v1444
      %v1466 = vmul.f32 %v1427, %v1444
      %v1467 = vmul.f32 %v1428, %v1444
      %v1468 = vmul.f32 %v1429, %v1444
      %v1469 = vmul.f32 %v1430, %v1444
      %v1470 = vmul.f32 %v1431, %v1444
      %v1471 = vmul.f32 %v1432, %v1444
      %v1472 = vmul.f32 %v1433, %v1444
      %v1473 = vmul.f32 %v1434, %v1444
      %v1474 = vmul.f32 %v1435, %v1444
      %v1475 = vmul.f32 %v1436, %v1444
      %v1476 = vmul.f32 %v1437, %v1444
      %v1477 = vmul.f32 %v1438, %v1444
      %v1478 = vld [vmem:[%s3] sm:$0x1]
      %v1480 = vlaneseq
      %v1481 = vshrl.u32 %v1480, 7
      %v1482 = vsub.s32 0, %v1481
      %v1483 = vrot.slane %v1478, %v1482
      %v1485 = vadd.f32 %v1446, %v1483
      %v1486 = vadd.f32 %v1447, %v1483
      %v1487 = vadd.f32 %v1448, %v1483
      %v1488 = vadd.f32 %v1449, %v1483
      %v1489 = vadd.f32 %v1450, %v1483
      %v1490 = vadd.f32 %v1451, %v1483
      %v1491 = vadd.f32 %v1452, %v1483
      %v1492 = vadd.f32 %v1453, %v1483
      %v1493 = vadd.f32 %v1454, %v1483
      %v1494 = vadd.f32 %v1455, %v1483
      %v1495 = vadd.f32 %v1456, %v1483
      %v1496 = vadd.f32 %v1457, %v1483
      %v1497 = vadd.f32 %v1458, %v1483
      %v1498 = vadd.f32 %v1459, %v1483
      %v1499 = vadd.f32 %v1460, %v1483
      %v1500 = vadd.f32 %v1461, %v1483
      %v1501 = vadd.f32 %v1462, %v1483
      %v1502 = vadd.f32 %v1463, %v1483
      %v1503 = vadd.f32 %v1464, %v1483
      %v1504 = vadd.f32 %v1465, %v1483
      %v1505 = vadd.f32 %v1466, %v1483
      %v1506 = vadd.f32 %v1467, %v1483
      %v1507 = vadd.f32 %v1468, %v1483
      %v1508 = vadd.f32 %v1469, %v1483
      %v1509 = vadd.f32 %v1470, %v1483
      %v1510 = vadd.f32 %v1471, %v1483
      %v1511 = vadd.f32 %v1472, %v1483
      %v1512 = vadd.f32 %v1473, %v1483
      %v1513 = vadd.f32 %v1474, %v1483
      %v1514 = vadd.f32 %v1475, %v1483
      %v1515 = vadd.f32 %v1476, %v1483
      %v1516 = vadd.f32 %v1477, %v1483
      %v1517 = vmax.f32 %v1485, 0.0
      %v1518 = vmax.f32 %v1486, 0.0
      %v1519 = vmax.f32 %v1487, 0.0
      %v1520 = vmax.f32 %v1488, 0.0
      %v1521 = vmax.f32 %v1489, 0.0
      %v1522 = vmax.f32 %v1490, 0.0
      %v1523 = vmax.f32 %v1491, 0.0
      %v1524 = vmax.f32 %v1492, 0.0
      %v1525 = vmax.f32 %v1493, 0.0
      %v1526 = vmax.f32 %v1494, 0.0
      %v1527 = vmax.f32 %v1495, 0.0
      %v1528 = vmax.f32 %v1496, 0.0
      %v1529 = vmax.f32 %v1497, 0.0
      %v1530 = vmax.f32 %v1498, 0.0
      %v1531 = vmax.f32 %v1499, 0.0
      %v1532 = vmax.f32 %v1500, 0.0
      %v1533 = vmax.f32 %v1501, 0.0
      %v1534 = vmax.f32 %v1502, 0.0
      %v1535 = vmax.f32 %v1503, 0.0
      %v1536 = vmax.f32 %v1504, 0.0
      %v1537 = vmax.f32 %v1505, 0.0
      %v1538 = vmax.f32 %v1506, 0.0
      %v1539 = vmax.f32 %v1507, 0.0
      %v1540 = vmax.f32 %v1508, 0.0
      %v1541 = vmax.f32 %v1509, 0.0
      %v1542 = vmax.f32 %v1510, 0.0
      %v1543 = vmax.f32 %v1511, 0.0
      %v1544 = vmax.f32 %v1512, 0.0
      %v1545 = vmax.f32 %v1513, 0.0
      %v1546 = vmax.f32 %v1514, 0.0
      %v1547 = vmax.f32 %v1515, 0.0
      %v1548 = vmax.f32 %v1516, 0.0
      %v1549 = vpack.c.bf16 %v1518, %v1517
      %v1550 = vpack.c.bf16 %v1520, %v1519
      %v1551 = vpack.c.bf16 %v1522, %v1521
      %v1552 = vpack.c.bf16 %v1524, %v1523
      %v1553 = vpack.c.bf16 %v1526, %v1525
      %v1554 = vpack.c.bf16 %v1528, %v1527
      %v1555 = vpack.c.bf16 %v1530, %v1529
      %v1556 = vpack.c.bf16 %v1532, %v1531
      %v1557 = vpack.c.bf16 %v1534, %v1533
      %v1558 = vpack.c.bf16 %v1536, %v1535
      %v1559 = vpack.c.bf16 %v1538, %v1537
      %v1560 = vpack.c.bf16 %v1540, %v1539
      %v1561 = vpack.c.bf16 %v1542, %v1541
      %v1562 = vpack.c.bf16 %v1544, %v1543
      %v1563 = vpack.c.bf16 %v1546, %v1545
      %v1564 = vpack.c.bf16 %v1548, %v1547
      %v1581 = vunpack.c.l.b16 %v1549
      %v1582 = vunpack.c.h.b16 %v1549
      %v1583 = vunpack.c.l.b16 %v1550
      %v1584 = vunpack.c.h.b16 %v1550
      %v1585 = vunpack.c.l.b16 %v1551
      %v1586 = vunpack.c.h.b16 %v1551
      %v1587 = vunpack.c.l.b16 %v1552
      %v1588 = vunpack.c.h.b16 %v1552
      %v1589 = vunpack.c.l.b16 %v1553
      %v1590 = vunpack.c.h.b16 %v1553
      %v1591 = vunpack.c.l.b16 %v1554
      %v1592 = vunpack.c.h.b16 %v1554
      %v1593 = vunpack.c.l.b16 %v1555
      %v1594 = vunpack.c.h.b16 %v1555
      %v1595 = vunpack.c.l.b16 %v1556
      %v1596 = vunpack.c.h.b16 %v1556
      %v1597 = vunpack.c.l.b16 %v1557
      %v1598 = vunpack.c.h.b16 %v1557
      %v1599 = vunpack.c.l.b16 %v1558
      %v1600 = vunpack.c.h.b16 %v1558
      %v1601 = vunpack.c.l.b16 %v1559
      %v1602 = vunpack.c.h.b16 %v1559
      %v1603 = vunpack.c.l.b16 %v1560
      %v1604 = vunpack.c.h.b16 %v1560
      %v1605 = vunpack.c.l.b16 %v1561
      %v1606 = vunpack.c.h.b16 %v1561
      %v1607 = vunpack.c.l.b16 %v1562
      %v1608 = vunpack.c.h.b16 %v1562
      %v1609 = vunpack.c.l.b16 %v1563
      %v1610 = vunpack.c.h.b16 %v1563
      %v1611 = vunpack.c.l.b16 %v1564
      %v1612 = vunpack.c.h.b16 %v1564
      %v1613 = vpack.c.b16 %v1581, %v1581
      %v1614 = vpack.c.b16 %v1582, %v1582
      %v1615 = vpack.c.b16 %v1583, %v1583
      %v1616 = vpack.c.b16 %v1584, %v1584
      %v1617 = vpack.c.b16 %v1585, %v1585
      %v1618 = vpack.c.b16 %v1586, %v1586
      %v1619 = vpack.c.b16 %v1587, %v1587
      %v1620 = vpack.c.b16 %v1588, %v1588
      %v1621 = vpack.c.b16 %v1589, %v1589
      %v1622 = vpack.c.b16 %v1590, %v1590
      %v1623 = vpack.c.b16 %v1591, %v1591
      %v1624 = vpack.c.b16 %v1592, %v1592
      %v1625 = vpack.c.b16 %v1593, %v1593
      %v1626 = vpack.c.b16 %v1594, %v1594
      %v1627 = vpack.c.b16 %v1595, %v1595
      %v1628 = vpack.c.b16 %v1596, %v1596
      %v1629 = vpack.c.b16 %v1597, %v1597
      %v1630 = vpack.c.b16 %v1598, %v1598
      %v1631 = vpack.c.b16 %v1599, %v1599
      %v1632 = vpack.c.b16 %v1600, %v1600
      %v1633 = vpack.c.b16 %v1601, %v1601
      %v1634 = vpack.c.b16 %v1602, %v1602
      %v1635 = vpack.c.b16 %v1603, %v1603
      %v1636 = vpack.c.b16 %v1604, %v1604
      %v1637 = vpack.c.b16 %v1605, %v1605
      %v1638 = vpack.c.b16 %v1606, %v1606
      %v1639 = vpack.c.b16 %v1607, %v1607
      %v1640 = vpack.c.b16 %v1608, %v1608
      %v1641 = vpack.c.b16 %v1609, %v1609
      %v1642 = vpack.c.b16 %v1610, %v1610
      %v1643 = vpack.c.b16 %v1611, %v1611
      %v1644 = vpack.c.b16 %v1612, %v1612
      %vm1677 = vcmask 60416
      %1678 = vst.msk [vmem:[%s235] sm:$0xf] %vm1677, %v1613
      %1679 = vst.msk [vmem:[%s235 + $0x4] sm:$0xf] %vm1677, %v1614
      %1680 = vst.msk [vmem:[%s235 + $0x8] sm:$0xf] %vm1677, %v1615
      %1681 = vst.msk [vmem:[%s235 + $0xc] sm:$0xf] %vm1677, %v1616
      %1682 = vst.msk [vmem:[%s235 + $0x10] sm:$0xf] %vm1677, %v1617
      %1683 = vst.msk [vmem:[%s235 + $0x14] sm:$0xf] %vm1677, %v1618
      %1684 = vst.msk [vmem:[%s235 + $0x18] sm:$0xf] %vm1677, %v1619
      %1685 = vst.msk [vmem:[%s235 + $0x1c] sm:$0xf] %vm1677, %v1620
      %1686 = vst.msk [vmem:[%s235 + $0x20] sm:$0xf] %vm1677, %v1621
      %1687 = vst.msk [vmem:[%s235 + $0x24] sm:$0xf] %vm1677, %v1622
      %1688 = vst.msk [vmem:[%s235 + $0x28] sm:$0xf] %vm1677, %v1623
      %1689 = vst.msk [vmem:[%s235 + $0x2c] sm:$0xf] %vm1677, %v1624
      %1690 = vst.msk [vmem:[%s235 + $0x30] sm:$0xf] %vm1677, %v1625
      %1691 = vst.msk [vmem:[%s235 + $0x34] sm:$0xf] %vm1677, %v1626
      %1692 = vst.msk [vmem:[%s235 + $0x38] sm:$0xf] %vm1677, %v1627
      %1693 = vst.msk [vmem:[%s235 + $0x3c] sm:$0xf] %vm1677, %v1628
      %1694 = vst.msk [vmem:[%s235 + $0x40] sm:$0xf] %vm1677, %v1629
      %1695 = vst.msk [vmem:[%s235 + $0x44] sm:$0xf] %vm1677, %v1630
      %1696 = vst.msk [vmem:[%s235 + $0x48] sm:$0xf] %vm1677, %v1631
      %1697 = vst.msk [vmem:[%s235 + $0x4c] sm:$0xf] %vm1677, %v1632
      %1698 = vst.msk [vmem:[%s235 + $0x50] sm:$0xf] %vm1677, %v1633
      %1699 = vst.msk [vmem:[%s235 + $0x54] sm:$0xf] %vm1677, %v1634
      %1700 = vst.msk [vmem:[%s235 + $0x58] sm:$0xf] %vm1677, %v1635
      %1701 = vst.msk [vmem:[%s235 + $0x5c] sm:$0xf] %vm1677, %v1636
      %1702 = vst.msk [vmem:[%s235 + $0x60] sm:$0xf] %vm1677, %v1637
      %1703 = vst.msk [vmem:[%s235 + $0x64] sm:$0xf] %vm1677, %v1638
      %1704 = vst.msk [vmem:[%s235 + $0x68] sm:$0xf] %vm1677, %v1639
      %1705 = vst.msk [vmem:[%s235 + $0x6c] sm:$0xf] %vm1677, %v1640
      %1706 = vst.msk [vmem:[%s235 + $0x70] sm:$0xf] %vm1677, %v1641
      %1707 = vst.msk [vmem:[%s235 + $0x74] sm:$0xf] %vm1677, %v1642
      %1708 = vst.msk [vmem:[%s235 + $0x78] sm:$0xf] %vm1677, %v1643
      %1709 = vst.msk [vmem:[%s235 + $0x7c] sm:$0xf] %vm1677, %v1644
      %s1710 = smul.u32 16, %s20
      %p1711 = scmp.lt.s32.totalorder %s19, 1
      %s1712 = scalar_select %p1711, %s19, 1
      %p1713 = scmp.lt.s32.totalorder %s1710, 15
      %s1714 = scalar_select %p1713, %s1710, 15
      %s1715 = smul.addr %s1714, 2
      %s1716 = smul.addr %s1712, 32
      %s1717 = sadd.s32 %s1715, %s1716
      %s1718 = smul.addr %s1717, 4
      %s1719 = scalar_lea.vmem %s4, %s1718
      // Predicated region
      $region37: #{tpu_custom_call.1} parent=35 // pred_check
        %p1720 = pneg %p138
      $region38: #{tpu_custom_call.1} parent=35 // pred_check_branch
        %1722 = sbr.rel (%p1720) target = $region40
      $region39: #{tpu_custom_call.1} parent=35 // pred_region
        %s1723 = smul.u32 16, %s20
      $region40: #{tpu_custom_call.1} parent=35 // pred_fallthru
        _
    $region36: #{tpu_custom_call.1} parent=5 // pred_fallthru
      _
    %p1724 = scmp.le.s32.totalorder 2, %s10
    // Predicated region
    $region41: #{tpu_custom_call.1} parent=5 // pred_check
      %p1725 = pneg %p1724
    $region42: #{tpu_custom_call.1} parent=5 // pred_check_branch
      %1727 = sbr.rel (%p1725) target = $region44
    $region43: #{tpu_custom_call.1} parent=5 // pred_region
      %s1728 = ssub.s32 %s10, 2
      // Predicated region
      $region45: #{tpu_custom_call.1} parent=43 // pred_check
        %p1729 = pneg %p144
      $region46: #{tpu_custom_call.1} parent=43 // pred_check_branch
        %1731 = sbr.rel (%p1729) target = $region48
      $region47: #{tpu_custom_call.1} parent=43 // pred_region
        %s1732 = smul.u32 16, %s22
        %p1733 = scmp.lt.s32.totalorder %s21, 1
        %s1734 = scalar_select %p1733, %s21, 1
        %p1735 = scmp.lt.s32.totalorder %s1732, 15
        %s1736 = scalar_select %p1735, %s1732, 15
        %s1737 = smul.addr %s1736, 2
        %s1738 = smul.addr %s1734, 32
        %s1739 = sadd.s32 %s1737, %s1738
        %s1740 = smul.addr %s1739, 4
        %s1741 = scalar_lea.vmem %s4, %s1740
      $region48: #{tpu_custom_call.1} parent=43 // pred_fallthru
        _
    $region44: #{tpu_custom_call.1} parent=5 // pred_fallthru
      _
  $region6: #{tpu_custom_call.1} parent=0 // loop_footer
    %s14 = sadd.s32 1, %s10
  $region7: #{tpu_custom_call.1} parent=0 // loop_footer_branch
    %9 = sbr.rel target = $region3
  $region8: #{tpu_custom_call.1} parent=0 // loop_exit
    _

</llo_original>
